<compile_context>
chip_gen: v5e
topology: v5e:2x2
jax: 0.10.0
libtpu: 0.0.40
codegen_flags: <defaults>
</compile_context>

<pallas_src>
import functools

import jax
import jax.numpy as jnp
from jax import lax
from jax.experimental import pallas as pl
from jax.experimental.pallas import tpu as pltpu


def _round_up(x, m):
    return (x + m - 1) // m * m


def _pick_block_h(h, w, max_m=2048):
    """Largest divisor of H whose tile M = TH*W stays <= max_m rows."""
    best = 1
    for th in range(1, h + 1):
        if h % th == 0 and th * w <= max_m:
            best = th
    return best


def _dsc_kernel(xp_ref, wf_ref, bf_ref, o_ref):
    # xp_ref: (1, H+2, W+2, Cpi)  zero-padded image (resident across h steps)
    # wf_ref: (9*Cpi, Cpo)        fused dw*pw weights, tap-major rows, bf16
    # bf_ref: (1, Cpo)            fused bias, f32
    # o_ref : (1, TH, W, Cpo)     output tile (lane-dense Cpo)
    TH = o_ref.shape[1]
    W = o_ref.shape[2]
    Cpi = xp_ref.shape[3]
    Cpo = o_ref.shape[3]

    h = pl.program_id(1)
    row0 = pl.multiple_of(h * TH, TH)

    # Rows covering this output tile plus the 1-row halo on each side.
    xrows = xp_ref[0, pl.ds(row0, TH + 2), :, :]          # (TH+2, W+2, Cpi)

    # im2col: the 9 shifted 3x3 taps, concatenated along the (dense) lane dim.
    taps = []
    for dy in range(3):
        for dx in range(3):
            t = xrows[dy:dy + TH, dx:dx + W, :]           # (TH, W, Cpi)
            taps.append(t.reshape(TH * W, Cpi))           # free sublane merge
    patches = jnp.concatenate(taps, axis=-1).astype(jnp.bfloat16)

    # One MXU matmul performs both the depthwise and the pointwise conv.
    y = jnp.dot(patches, wf_ref[...], preferred_element_type=jnp.float32)
    y = y + bf_ref[...]
    o_ref[0] = y.reshape(TH, W, Cpo).astype(o_ref.dtype)


@functools.partial(jax.jit, static_argnames=("block_h",))
def dsc_forward(x_nchw, dw_w, dw_b, pw_w, pw_b, *, block_h=None):
    """x_nchw: (B, C_in, H, W); dw_w: (C_in, 1, 3, 3); dw_b: (C_in,);
    pw_w: (C_out, C_in, 1, 1); pw_b: (C_out,). Returns (B, C_out, H, W)."""
    B, C_in, H, W = x_nchw.shape
    C_out = pw_w.shape[0]
    Cpi = _round_up(C_in, 128)          # lane-dense channel padding
    Cpo = _round_up(C_out, 128)
    TH = block_h if block_h is not None else _pick_block_h(H, W)
    assert H % TH == 0
    n_h = H // TH

    # ---- glue (plain JAX, fused by XLA): layout, halo pad, weight fusion ----
    x_nhwc = jnp.transpose(x_nchw, (0, 2, 3, 1))                     # (B,H,W,Ci)
    xp = jnp.pad(x_nhwc, ((0, 0), (1, 1), (1, 1), (0, Cpi - C_in)))  # (B,H+2,W+2,Cpi)

    pw2d = pw_w[:, :, 0, 0]                                          # (Co, Ci)
    wf = jnp.einsum("iyx,oi->yxio", dw_w[:, 0], pw2d)                # (3,3,Ci,Co)
    wf = jnp.pad(wf, ((0, 0), (0, 0), (0, Cpi - C_in), (0, Cpo - C_out)))
    wf = wf.reshape(9 * Cpi, Cpo).astype(jnp.bfloat16)               # tap-major K
    bf = jnp.pad(pw_b + pw2d @ dw_b, (0, Cpo - C_out))
    bf = bf.reshape(1, Cpo).astype(jnp.float32)

    itemsize = jnp.dtype(x_nchw.dtype).itemsize
    cost = pl.CostEstimate(
        flops=2 * B * H * W * (9 * C_in) * C_out,
        transcendentals=0,
        bytes_accessed=(xp.size * xp.dtype.itemsize
                        + wf.size * 2 + bf.size * 4
                        + B * H * W * Cpo * itemsize),
    )

    out_pad = pl.pallas_call(
        _dsc_kernel,
        out_shape=jax.ShapeDtypeStruct((B, H, W, Cpo), x_nchw.dtype),
        grid_spec=pltpu.PrefetchScalarGridSpec(
            num_scalar_prefetch=0,
            grid=(B, n_h),
            in_specs=[
                # Full padded image per batch element; block index does not
                # change with h, so it is fetched once and stays resident.
                pl.BlockSpec((1, H + 2, W + 2, Cpi), lambda b, h: (b, 0, 0, 0)),
                pl.BlockSpec((9 * Cpi, Cpo), lambda b, h: (0, 0)),
                pl.BlockSpec((1, Cpo), lambda b, h: (0, 0)),
            ],
            out_specs=pl.BlockSpec((1, TH, W, Cpo), lambda b, h: (b, h, 0, 0)),
        ),
        compiler_params=pltpu.CompilerParams(
            dimension_semantics=("parallel", "parallel"),
            vmem_limit_bytes=32 * 1024 * 1024,
        ),
        cost_estimate=cost,
    )(xp, wf, bf)

    out = out_pad[:, :, :, :C_out]                # drop padded output lanes
    return jnp.transpose(out, (0, 3, 1, 2))       # back to NCHW


def _reference(x_nchw, dw_w, dw_b, pw_w, pw_b):
    """Plain-JAX NCHW reference mirroring the PyTorch module (f32)."""
    c_in = x_nchw.shape[1]
    dn = ("NCHW", "OIHW", "NCHW")
    dw = lax.conv_general_dilated(
        x_nchw, dw_w, window_strides=(1, 1), padding=((1, 1), (1, 1)),
        dimension_numbers=dn, feature_group_count=c_in)
    dw = dw + dw_b.reshape(1, -1, 1, 1)
    pw = lax.conv_general_dilated(
        dw, pw_w, window_strides=(1, 1), padding=((0, 0), (0, 0)),
        dimension_numbers=dn)
    return pw + pw_b.reshape(1, -1, 1, 1)


if __name__ == "__main__":
    B, C_in, C_out, H, W = 2, 4, 8, 16, 16
    key = jax.random.PRNGKey(0)
    k1, k2, k3, k4, k5 = jax.random.split(key, 5)
    x = jax.random.normal(k1, (B, C_in, H, W), jnp.float32)
    dw_w = 0.1 * jax.random.normal(k2, (C_in, 1, 3, 3), jnp.float32)
    dw_b = 0.1 * jax.random.normal(k3, (C_in,), jnp.float32)
    pw_w = 0.1 * jax.random.normal(k4, (C_out, C_in, 1, 1), jnp.float32)
    pw_b = 0.1 * jax.random.normal(k5, (C_out,), jnp.float32)

    out = dsc_forward(x, dw_w, dw_b, pw_w, pw_b)
    out = jax.block_until_ready(out)

    ref = _reference(x, dw_w, dw_b, pw_w, pw_b)
    assert out.shape == (B, C_out, H, W)
    # bf16 MXU operands with f32 accumulation -> validate at bf16 tolerance.
    assert jnp.allclose(out, ref, atol=2e-2, rtol=2e-2), "mismatch vs reference"
    print("KERNEL_OK")
</pallas_src>

<mosaic_0001>
module attributes {stable_mosaic.version = 11 : i64} {
  func.func @_dsc_kernel(%arg0: i32, %arg1: i32, %arg2: memref<1x18x18x128xf32, #tpu.memory_space<vmem>>, %arg3: memref<1152x128xbf16, #tpu.memory_space<vmem>>, %arg4: memref<1x128xf32, #tpu.memory_space<vmem>>, %arg5: memref<1x16x16x128xf32, #tpu.memory_space<vmem>>) attributes {dimension_semantics = [#tpu.dimension_semantics<parallel>, #tpu.dimension_semantics<parallel>], iteration_bounds = array<i64: 2, 1>, scalar_prefetch = 0 : i64, scratch_operands = 0 : i64, tpu.core_type = #tpu.core_type<tc>, window_params = [{transform_indices = @transform_0, window_bounds = array<i64: 1, 18, 18, 128>}, {pipeline_mode = #tpu.pipeline_mode<synchronous>, transform_indices = @transform_1, window_bounds = array<i64: 1152, 128>}, {pipeline_mode = #tpu.pipeline_mode<synchronous>, transform_indices = @transform_2, window_bounds = array<i64: 1, 128>}, {transform_indices = @transform_3, window_bounds = array<i64: 1, 16, 16, 128>}]} {
    %c16_i32 = arith.constant 16 : i32
    %0 = arith.muli %arg1, %c16_i32 : i32
    %1 = tpu.assume_multiple %0, 16 : i32
    %c0 = arith.constant 0 : index
    %2 = arith.index_cast %1 : i32 to index
    %c0_0 = arith.constant 0 : index
    %c0_1 = arith.constant 0 : index
    %3 = vector.load %arg2[%c0, %2, %c0_0, %c0_1] : memref<1x18x18x128xf32, #tpu.memory_space<vmem>>, vector<1x18x18x128xf32>
    %4 = vector.shape_cast %3 : vector<1x18x18x128xf32> to vector<18x18x128xf32>
    %5 = vector.extract_strided_slice %4 {offsets = [0, 0, 0], sizes = [16, 16, 128], strides = [1, 1, 1]} : vector<18x18x128xf32> to vector<16x16x128xf32>
    %6 = vector.shape_cast %5 : vector<16x16x128xf32> to vector<256x128xf32>
    %7 = vector.extract_strided_slice %4 {offsets = [0, 1, 0], sizes = [16, 16, 128], strides = [1, 1, 1]} : vector<18x18x128xf32> to vector<16x16x128xf32>
    %8 = vector.shape_cast %7 : vector<16x16x128xf32> to vector<256x128xf32>
    %9 = vector.extract_strided_slice %4 {offsets = [0, 2, 0], sizes = [16, 16, 128], strides = [1, 1, 1]} : vector<18x18x128xf32> to vector<16x16x128xf32>
    %10 = vector.shape_cast %9 : vector<16x16x128xf32> to vector<256x128xf32>
    %11 = vector.extract_strided_slice %4 {offsets = [1, 0, 0], sizes = [16, 16, 128], strides = [1, 1, 1]} : vector<18x18x128xf32> to vector<16x16x128xf32>
    %12 = vector.shape_cast %11 : vector<16x16x128xf32> to vector<256x128xf32>
    %13 = vector.extract_strided_slice %4 {offsets = [1, 1, 0], sizes = [16, 16, 128], strides = [1, 1, 1]} : vector<18x18x128xf32> to vector<16x16x128xf32>
    %14 = vector.shape_cast %13 : vector<16x16x128xf32> to vector<256x128xf32>
    %15 = vector.extract_strided_slice %4 {offsets = [1, 2, 0], sizes = [16, 16, 128], strides = [1, 1, 1]} : vector<18x18x128xf32> to vector<16x16x128xf32>
    %16 = vector.shape_cast %15 : vector<16x16x128xf32> to vector<256x128xf32>
    %17 = vector.extract_strided_slice %4 {offsets = [2, 0, 0], sizes = [16, 16, 128], strides = [1, 1, 1]} : vector<18x18x128xf32> to vector<16x16x128xf32>
    %18 = vector.shape_cast %17 : vector<16x16x128xf32> to vector<256x128xf32>
    %19 = vector.extract_strided_slice %4 {offsets = [2, 1, 0], sizes = [16, 16, 128], strides = [1, 1, 1]} : vector<18x18x128xf32> to vector<16x16x128xf32>
    %20 = vector.shape_cast %19 : vector<16x16x128xf32> to vector<256x128xf32>
    %21 = vector.extract_strided_slice %4 {offsets = [2, 2, 0], sizes = [16, 16, 128], strides = [1, 1, 1]} : vector<18x18x128xf32> to vector<16x16x128xf32>
    %22 = vector.shape_cast %21 : vector<16x16x128xf32> to vector<256x128xf32>
    %23 = tpu.concatenate %6, %8, %10, %12, %14, %16, %18, %20, %22 in 1 : vector<256x128xf32>, vector<256x128xf32>, vector<256x128xf32>, vector<256x128xf32>, vector<256x128xf32>, vector<256x128xf32>, vector<256x128xf32>, vector<256x128xf32>, vector<256x128xf32> -> vector<256x1152xf32>
    %24 = arith.truncf %23 : vector<256x1152xf32> to vector<256x1152xbf16>
    %c0_2 = arith.constant 0 : index
    %c0_3 = arith.constant 0 : index
    %25 = vector.load %arg3[%c0_2, %c0_3] : memref<1152x128xbf16, #tpu.memory_space<vmem>>, vector<1152x128xbf16>
    %cst = arith.constant dense<0.000000e+00> : vector<256x128xf32>
    %26 = tpu.matmul %24, %25, %cst {dimension_numbers = #tpu.dot_dimension_numbers<[1], [0], [0], [1], [0, 0, 1, 1], [], []>} : vector<256x1152xbf16>, vector<1152x128xbf16>, vector<256x128xf32> -> vector<256x128xf32>
    %c0_4 = arith.constant 0 : index
    %c0_5 = arith.constant 0 : index
    %27 = vector.load %arg4[%c0_4, %c0_5] : memref<1x128xf32, #tpu.memory_space<vmem>>, vector<1x128xf32>
    %28 = vector.broadcast %27 : vector<1x128xf32> to vector<256x128xf32>
    %29 = arith.addf %26, %28 : vector<256x128xf32>
    %30 = vector.shape_cast %29 : vector<256x128xf32> to vector<16x16x128xf32>
    %c0_6 = arith.constant 0 : index
    %c0_7 = arith.constant 0 : index
    %c0_8 = arith.constant 0 : index
    %c0_9 = arith.constant 0 : index
    %31 = vector.load %arg5[%c0_6, %c0_7, %c0_8, %c0_9] : memref<1x16x16x128xf32, #tpu.memory_space<vmem>>, vector<1x16x16x128xf32>
    %32 = vector.shape_cast %31 : vector<1x16x16x128xf32> to vector<16x16x128xf32>
    %33 = vector.shape_cast %30 : vector<16x16x128xf32> to vector<1x16x16x128xf32>
    tpu.vector_store %arg5[%c0_6, %c0_7, %c0_8, %c0_9], %33 {strides = array<i32>} : memref<1x16x16x128xf32, #tpu.memory_space<vmem>>, vector<1x16x16x128xf32>,
    return
  }
  func.func @transform_0(%arg0: i32, %arg1: i32) -> (i32, i32, i32, i32) {
    %c0_i32 = arith.constant 0 : i32
    %c0_i32_0 = arith.constant 0 : i32
    %c0_i32_1 = arith.constant 0 : i32
    %c0_i32_2 = arith.constant 0 : i32
    return %arg0, %c0_i32, %c0_i32_0, %c0_i32_1 : i32, i32, i32, i32
  }
  func.func @transform_1(%arg0: i32, %arg1: i32) -> (i32, i32) {
    %c0_i32 = arith.constant 0 : i32
    %c0_i32_0 = arith.constant 0 : i32
    %c0_i32_1 = arith.constant 0 : i32
    return %c0_i32, %c0_i32_0 : i32, i32
  }
  func.func @transform_2(%arg0: i32, %arg1: i32) -> (i32, i32) {
    %c0_i32 = arith.constant 0 : i32
    %c0_i32_0 = arith.constant 0 : i32
    %c0_i32_1 = arith.constant 0 : i32
    return %c0_i32, %c0_i32_0 : i32, i32
  }
  func.func @transform_3(%arg0: i32, %arg1: i32) -> (i32, i32, i32, i32) {
    %c0_i32 = arith.constant 0 : i32
    %c0_i32_0 = arith.constant 0 : i32
    %c0_i32_1 = arith.constant 0 : i32
    return %arg0, %arg1, %c0_i32, %c0_i32_0 : i32, i32, i32, i32
  }
}

</mosaic_0001>

<llo_original>
// kernel: dsc_forward.1
$region0: #{dsc_forward.1}
  #allocation0 [shape = 'u32[]', space=smem, size = 0x4, offset = 0x4, fixed_abs, tag = 'smem constant byte address 0x4 - core index']
  #allocation1 [shape = 'u32[72,128]{1,0:T(1,128)}', space=vmem, size = 0x9000, scoped, tag = 'internal scratch']
  %s0 = inlined_call_operand.vmem [shape: f32[2,18,18,128], index: 0, kind: input, shape index: {}]
  %s1 = inlined_call_operand.vmem [shape: bf16[1152,128], index: 1, kind: input, shape index: {}]
  %s2 = inlined_call_operand.vmem [shape: f32[1,128], index: 2, kind: input, shape index: {}]
  %s3 = inlined_call_operand.vmem [shape: f32[2,16,16,128], index: 3, kind: output, shape index: {}]
  %s4 = sld [smem:[#allocation0]]
  $region45: #{dsc_forward.1} parent=0
    _
  %s6 = ssub.s32 1, %s4
  %s7 = scalar_select 0, %s6, %s4
  loop: start=0, step=1, limit=4
  $region2: #{dsc_forward.1} parent=0 // loop_pre_header
    _
  $region3: #{dsc_forward.1} parent=0 // loop_header
    %s9 = sphi 0, %s13
    %p10 = scmp.ge.s32.totalorder %s9, 4
    %s16 = sphi 0, %s28
    %s17 = sphi 0, %s24
    %s18 = sphi 0, %s16
    %s19 = sphi 0, %s17
    %s20 = sphi 0, %s18
    %s21 = sphi 0, %s19
    %s31 = sphi 0, %s33
    %s34 = sphi 0, %s31
    %s35 = sphi 0, %s34
    %s51 = sphi 0, %s35
    %s55 = sphi 0, %s55
    %s57 = sphi 0, %s55
    %s58 = sphi 0, %s57
    %s72 = sphi 0, %s58
    %s76 = sphi 0, %s76
    %s78 = sphi 0, %s76
    %s79 = sphi 0, %s78
    %s93 = sphi 0, %s79
    %s101 = sphi 0, %s103
    %s104 = sphi 0, %s101
    %s105 = sphi 0, %s104
    %s121 = sphi 0, %s105
  $region4: #{dsc_forward.1} parent=0 // loop_header_branch
    %12 = sbr.rel (%p10) target = $region8
  $region5: #{dsc_forward.1} parent=0 // loop_body
    %s14 = ssub.s32 %s9, 1
    %s15 = ssub.s32 %s9, 2
    %s22 = sadd.s32 1, %s17
    %p23 = scmp.ge.s32.totalorder %s22, 1
    %s24 = scalar_select %p23, 0, %s22
    %s25 = sadd.s32 1, %s16
    %s26 = scalar_select %p23, %s25, %s16
    %p27 = scmp.ge.s32.totalorder %s26, 2
    %s28 = scalar_select %p27, 0, %s26
    %s29 = ssub.s32 %s16, %s28
    %p30 = scmp.eq.s32.totalorder %s29, 0
    %s32 = sadd.s32 %s31, 1
    %s33 = scalar_select %p30, %s31, %s32
    %p36 = pneg %p30
    %p37 = scmp.eq.s32.totalorder %s9, 1
    %p38 = por %p36, %p37
    %p39 = scmp.ne.s32.totalorder %s31, %s34
    %p40 = scmp.eq.s32.totalorder %s9, 0
    %p41 = por %p39, %p40
    %p42 = scmp.ne.s32.totalorder %s31, %s34
    %p43 = scmp.eq.s32.totalorder %s14, 1
    %p44 = por %p42, %p43
    %p45 = scmp.ne.s32.totalorder %s34, %s35
    %p46 = scmp.eq.s32.totalorder %s14, 0
    %p47 = por %p45, %p46
    %p48 = scmp.ne.s32.totalorder %s34, %s35
    %p49 = scmp.eq.s32.totalorder %s15, 1
    %p50 = por %p48, %p49
    %p52 = scmp.ne.s32.totalorder %s35, %s51
    %p53 = scmp.eq.s32.totalorder %s15, 0
    %p54 = por %p52, %p53
    %s56 = sadd.s32 %s55, 1
    %p59 = scmp.eq.s32.totalorder %s9, 1
    %p60 = scmp.ne.s32.totalorder %s55, %s57
    %p61 = scmp.eq.s32.totalorder %s9, 0
    %p62 = por %p60, %p61
    %p63 = scmp.ne.s32.totalorder %s55, %s57
    %p64 = scmp.eq.s32.totalorder %s14, 1
    %p65 = por %p63, %p64
    %p66 = scmp.ne.s32.totalorder %s57, %s58
    %p67 = scmp.eq.s32.totalorder %s14, 0
    %p68 = por %p66, %p67
    %p69 = scmp.ne.s32.totalorder %s57, %s58
    %p70 = scmp.eq.s32.totalorder %s15, 1
    %p71 = por %p69, %p70
    %p73 = scmp.ne.s32.totalorder %s58, %s72
    %p74 = scmp.eq.s32.totalorder %s15, 0
    %p75 = por %p73, %p74
    %s77 = sadd.s32 %s76, 1
    %p80 = scmp.eq.s32.totalorder %s9, 1
    %p81 = scmp.ne.s32.totalorder %s76, %s78
    %p82 = scmp.eq.s32.totalorder %s9, 0
    %p83 = por %p81, %p82
    %p84 = scmp.ne.s32.totalorder %s76, %s78
    %p85 = scmp.eq.s32.totalorder %s14, 1
    %p86 = por %p84, %p85
    %p87 = scmp.ne.s32.totalorder %s78, %s79
    %p88 = scmp.eq.s32.totalorder %s14, 0
    %p89 = por %p87, %p88
    %p90 = scmp.ne.s32.totalorder %s78, %s79
    %p91 = scmp.eq.s32.totalorder %s15, 1
    %p92 = por %p90, %p91
    %p94 = scmp.ne.s32.totalorder %s79, %s93
    %p95 = scmp.eq.s32.totalorder %s15, 0
    %p96 = por %p94, %p95
    %s97 = ssub.s32 %s16, %s28
    %s98 = ssub.s32 %s17, %s24
    %s99 = sor.u32 %s97, %s98
    %p100 = scmp.eq.s32.totalorder %s99, 0
    %s102 = sadd.s32 %s101, 1
    %s103 = scalar_select %p100, %s101, %s102
    %p106 = pneg %p100
    %p107 = scmp.eq.s32.totalorder %s9, 1
    %p108 = por %p106, %p107
    %p109 = scmp.ne.s32.totalorder %s101, %s104
    %p110 = scmp.eq.s32.totalorder %s9, 0
    %p111 = por %p109, %p110
    %p112 = scmp.ne.s32.totalorder %s101, %s104
    %p113 = scmp.eq.s32.totalorder %s14, 1
    %p114 = por %p112, %p113
    %p115 = scmp.ne.s32.totalorder %s104, %s105
    %p116 = scmp.eq.s32.totalorder %s14, 0
    %p117 = por %p115, %p116
    %p118 = scmp.ne.s32.totalorder %s104, %s105
    %p119 = scmp.eq.s32.totalorder %s15, 1
    %p120 = por %p118, %p119
    %p122 = scmp.ne.s32.totalorder %s105, %s121
    %p123 = scmp.eq.s32.totalorder %s15, 0
    %p124 = por %p122, %p123
    %p125 = scmp.le.s32.totalorder 1, %s9
    %p126 = scmp.lt.s32.totalorder %s9, 3
    %p127 = pnand %p125, %p126
    %p128 = pneg %p127
    // Predicated region
    $region9: #{dsc_forward.1} parent=5 // pred_check
      _
    $region10: #{dsc_forward.1} parent=5 // pred_check_branch
      %130 = sbr.rel (%p127) target = $region12
    $region11: #{dsc_forward.1} parent=5 // pred_region
      %s131 = ssub.s32 %s9, 1
      // Predicated region
      $region13: #{dsc_forward.1} parent=11 // pred_check
        %p132 = pneg %p68
      $region14: #{dsc_forward.1} parent=11 // pred_check_branch
        %134 = sbr.rel (%p132) target = $region16
      $region15: #{dsc_forward.1} parent=11 // pred_region
        _
      $region16: #{dsc_forward.1} parent=11 // pred_fallthru
        _
      // Predicated region
      $region17: #{dsc_forward.1} parent=11 // pred_check
        %p135 = pneg %p89
      $region18: #{dsc_forward.1} parent=11 // pred_check_branch
        %137 = sbr.rel (%p135) target = $region20
      $region19: #{dsc_forward.1} parent=11 // pred_region
        _
      $region20: #{dsc_forward.1} parent=11 // pred_fallthru
        _
    $region12: #{dsc_forward.1} parent=5 // pred_fallthru
      _
    %p138 = scmp.lt.s32.totalorder %s9, 2
    // Predicated region
    $region21: #{dsc_forward.1} parent=5 // pred_check
      %p139 = pneg %p138
    $region22: #{dsc_forward.1} parent=5 // pred_check_branch
      %141 = sbr.rel (%p139) target = $region24
    $region23: #{dsc_forward.1} parent=5 // pred_region
      // Predicated region
      $region25: #{dsc_forward.1} parent=23 // pred_check
        %p142 = pneg %p41
      $region26: #{dsc_forward.1} parent=23 // pred_check_branch
        %144 = sbr.rel (%p142) target = $region28
      $region27: #{dsc_forward.1} parent=23 // pred_region
        %p145 = scmp.lt.s32.totalorder %s16, 1
        %s146 = scalar_select %p145, %s16, 1
        %s147 = smul.addr %s146, 54
        %s148 = smul.addr %s147, 8
        %s149 = scalar_lea.vmem %s0, %s148
      $region28: #{dsc_forward.1} parent=23 // pred_fallthru
        _
    $region24: #{dsc_forward.1} parent=5 // pred_fallthru
      _
    %p150 = scmp.le.s32.totalorder 1, %s9
    %p151 = scmp.lt.s32.totalorder %s9, 3
    %p152 = pnand %p150, %p151
    %p153 = pneg %p152
    // Predicated region
    $region29: #{dsc_forward.1} parent=5 // pred_check
      _
    $region30: #{dsc_forward.1} parent=5 // pred_check_branch
      %155 = sbr.rel (%p152) target = $region32
    $region31: #{dsc_forward.1} parent=5 // pred_region
      %s156 = ssub.s32 %s9, 1
      %p157 = scmp.lt.s32.totalorder %s18, 1
      %s158 = scalar_select %p157, %s18, 1
      %s159 = smul.addr %s158, 54
      %s160 = smul.addr %s159, 8
      %s161 = scalar_lea.vmem %s0, %s160
      %p162 = pneg %p47
      %p163 = pneg %p44
      %p164 = pneg %p68
      %p165 = pneg %p65
      %p166 = pneg %p89
      %p167 = pneg %p86
      %p168 = pneg %p117
      %p169 = pneg %p114
      %s170 = smul.u32 16, %s19
      %p171 = scmp.lt.s32.totalorder %s18, 1
      %s172 = scalar_select %p171, %s18, 1
      %p173 = scmp.lt.s32.totalorder %s170, 15
      %s174 = scalar_select %p173, %s170, 15
      %s175 = smul.addr %s174, 2
      %s176 = smul.addr %s172, 32
      %s177 = sadd.s32 %s175, %s176
      %s178 = smul.addr %s177, 8
      %s179 = scalar_lea.vmem %s3, %s178
      %p180 = scmp.lt.s32.totalorder %s18, 1
      %s181 = scalar_select %p180, %s18, 1
      %s182 = smul.addr %s181, 54
      %s183 = smul.addr %s182, 8
      %s184 = scalar_lea.vmem %s0, %s183
      %s185 = smul.u32 16, %s19
      %p186 = scmp.lt.s32.totalorder %s18, 1
      %s187 = scalar_select %p186, %s18, 1
      %p188 = scmp.lt.s32.totalorder %s185, 15
      %s189 = scalar_select %p188, %s185, 15
      %s190 = smul.addr %s189, 2
      %s191 = smul.addr %s187, 32
      %s192 = sadd.s32 %s190, %s191
      %s193 = smul.addr %s192, 8
      %s194 = scalar_lea.vmem %s3, %s193
      %s195 = smul.u32 16, %s19
      %s196 = smul.u32 %s19, 16
      %s197 = smul.u32 %s196, 24
      %s198 = scalar_lea.vmem %s184, %s197
      %v199 = vld [vmem:[%s198] sm:$0xff]
      %v200 = vld [vmem:[%s198 + $0x8] sm:$0xff]
      %v201 = vld [vmem:[%s198 + $0x10] sm:$0x3]
      %v202 = vld [vmem:[%s198 + $0x18] sm:$0xff]
      %v203 = vld [vmem:[%s198 + $0x20] sm:$0xff]
      %v204 = vld [vmem:[%s198 + $0x28] sm:$0x3]
      %v205 = vld [vmem:[%s198 + $0x30] sm:$0xff]
      %v206 = vld [vmem:[%s198 + $0x38] sm:$0xff]
      %v207 = vld [vmem:[%s198 + $0x40] sm:$0x3]
      %v208 = vld [vmem:[%s198 + $0x48] sm:$0xff]
      %v209 = vld [vmem:[%s198 + $0x50] sm:$0xff]
      %v210 = vld [vmem:[%s198 + $0x58] sm:$0x3]
      %v211 = vld [vmem:[%s198 + $0x60] sm:$0xff]
      %v212 = vld [vmem:[%s198 + $0x68] sm:$0xff]
      %v213 = vld [vmem:[%s198 + $0x70] sm:$0x3]
      %v214 = vld [vmem:[%s198 + $0x78] sm:$0xff]
      %v215 = vld [vmem:[%s198 + $0x80] sm:$0xff]
      %v216 = vld [vmem:[%s198 + $0x88] sm:$0x3]
      %v217 = vld [vmem:[%s198 + $0x90] sm:$0xff]
      %v218 = vld [vmem:[%s198 + $0x98] sm:$0xff]
      %v219 = vld [vmem:[%s198 + $0xa0] sm:$0x3]
      %v220 = vld [vmem:[%s198 + $0xa8] sm:$0xff]
      %v221 = vld [vmem:[%s198 + $0xb0] sm:$0xff]
      %v222 = vld [vmem:[%s198 + $0xb8] sm:$0x3]
      %v223 = vld [vmem:[%s198 + $0xc0] sm:$0xff]
      %v224 = vld [vmem:[%s198 + $0xc8] sm:$0xff]
      %v225 = vld [vmem:[%s198 + $0xd0] sm:$0x3]
      %v226 = vld [vmem:[%s198 + $0xd8] sm:$0xff]
      %v227 = vld [vmem:[%s198 + $0xe0] sm:$0xff]
      %v228 = vld [vmem:[%s198 + $0xe8] sm:$0x3]
      %v229 = vld [vmem:[%s198 + $0xf0] sm:$0xff]
      %v230 = vld [vmem:[%s198 + $0xf8] sm:$0xff]
      %v231 = vld [vmem:[%s198 + $0x100] sm:$0x3]
      %v232 = vld [vmem:[%s198 + $0x108] sm:$0xff]
      %v233 = vld [vmem:[%s198 + $0x110] sm:$0xff]
      %v234 = vld [vmem:[%s198 + $0x118] sm:$0x3]
      %v235 = vld [vmem:[%s198 + $0x120] sm:$0xff]
      %v236 = vld [vmem:[%s198 + $0x128] sm:$0xff]
      %v237 = vld [vmem:[%s198 + $0x130] sm:$0x3]
      %v238 = vld [vmem:[%s198 + $0x138] sm:$0xff]
      %v239 = vld [vmem:[%s198 + $0x140] sm:$0xff]
      %v240 = vld [vmem:[%s198 + $0x148] sm:$0x3]
      %v241 = vld [vmem:[%s198 + $0x150] sm:$0xff]
      %v242 = vld [vmem:[%s198 + $0x158] sm:$0xff]
      %v243 = vld [vmem:[%s198 + $0x160] sm:$0x3]
      %v244 = vld [vmem:[%s198 + $0x168] sm:$0xff]
      %v245 = vld [vmem:[%s198 + $0x170] sm:$0xff]
      %v246 = vld [vmem:[%s198 + $0x178] sm:$0x3]
      %v247 = vld [vmem:[%s198 + $0x180] sm:$0xff]
      %v248 = vld [vmem:[%s198 + $0x188] sm:$0xff]
      %v249 = vld [vmem:[%s198 + $0x190] sm:$0x3]
      %v250 = vld [vmem:[%s198 + $0x198] sm:$0xff]
      %v251 = vld [vmem:[%s198 + $0x1a0] sm:$0xff]
      %v252 = vld [vmem:[%s198 + $0x1a8] sm:$0x3]
      %vm301 = vcmask 1046528
      %v302 = vrot.slane %v199, 1
      %v303 = vrot.slane %v200, 1
      %v304 = vsel %vm301, %v302, %v303
      %v305 = vrot.slane %v201, 1
      %v306 = vsel %vm301, %v303, %v305
      %v307 = vrot.slane %v202, 1
      %v308 = vrot.slane %v203, 1
      %v309 = vsel %vm301, %v307, %v308
      %v310 = vrot.slane %v204, 1
      %v311 = vsel %vm301, %v308, %v310
      %v312 = vrot.slane %v205, 1
      %v313 = vrot.slane %v206, 1
      %v314 = vsel %vm301, %v312, %v313
      %v315 = vrot.slane %v207, 1
      %v316 = vsel %vm301, %v313, %v315
      %v317 = vrot.slane %v208, 1
      %v318 = vrot.slane %v209, 1
      %v319 = vsel %vm301, %v317, %v318
      %v320 = vrot.slane %v210, 1
      %v321 = vsel %vm301, %v318, %v320
      %v322 = vrot.slane %v211, 1
      %v323 = vrot.slane %v212, 1
      %v324 = vsel %vm301, %v322, %v323
      %v325 = vrot.slane %v213, 1
      %v326 = vsel %vm301, %v323, %v325
      %v327 = vrot.slane %v214, 1
      %v328 = vrot.slane %v215, 1
      %v329 = vsel %vm301, %v327, %v328
      %v330 = vrot.slane %v216, 1
      %v331 = vsel %vm301, %v328, %v330
      %v332 = vrot.slane %v217, 1
      %v333 = vrot.slane %v218, 1
      %v334 = vsel %vm301, %v332, %v333
      %v335 = vrot.slane %v219, 1
      %v336 = vsel %vm301, %v333, %v335
      %v337 = vrot.slane %v220, 1
      %v338 = vrot.slane %v221, 1
      %v339 = vsel %vm301, %v337, %v338
      %v340 = vrot.slane %v222, 1
      %v341 = vsel %vm301, %v338, %v340
      %v342 = vrot.slane %v223, 1
      %v343 = vrot.slane %v224, 1
      %v344 = vsel %vm301, %v342, %v343
      %v345 = vrot.slane %v225, 1
      %v346 = vsel %vm301, %v343, %v345
      %v347 = vrot.slane %v226, 1
      %v348 = vrot.slane %v227, 1
      %v349 = vsel %vm301, %v347, %v348
      %v350 = vrot.slane %v228, 1
      %v351 = vsel %vm301, %v348, %v350
      %v352 = vrot.slane %v229, 1
      %v353 = vrot.slane %v230, 1
      %v354 = vsel %vm301, %v352, %v353
      %v355 = vrot.slane %v231, 1
      %v356 = vsel %vm301, %v353, %v355
      %v357 = vrot.slane %v232, 1
      %v358 = vrot.slane %v233, 1
      %v359 = vsel %vm301, %v357, %v358
      %v360 = vrot.slane %v234, 1
      %v361 = vsel %vm301, %v358, %v360
      %v362 = vrot.slane %v235, 1
      %v363 = vrot.slane %v236, 1
      %v364 = vsel %vm301, %v362, %v363
      %v365 = vrot.slane %v237, 1
      %v366 = vsel %vm301, %v363, %v365
      %v367 = vrot.slane %v238, 1
      %v368 = vrot.slane %v239, 1
      %v369 = vsel %vm301, %v367, %v368
      %v370 = vrot.slane %v240, 1
      %v371 = vsel %vm301, %v368, %v370
      %v372 = vrot.slane %v241, 1
      %v373 = vrot.slane %v242, 1
      %v374 = vsel %vm301, %v372, %v373
      %v375 = vrot.slane %v243, 1
      %v376 = vsel %vm301, %v373, %v375
      %v377 = vrot.slane %v244, 1
      %v378 = vrot.slane %v245, 1
      %v379 = vsel %vm301, %v377, %v378
      %v380 = vrot.slane %v246, 1
      %v381 = vsel %vm301, %v378, %v380
      %vm414 = vcmask 1045504
      %v415 = vrot.slane %v199, 2
      %v416 = vrot.slane %v200, 2
      %v417 = vsel %vm414, %v415, %v416
      %v418 = vrot.slane %v201, 2
      %v419 = vsel %vm414, %v416, %v418
      %v420 = vrot.slane %v202, 2
      %v421 = vrot.slane %v203, 2
      %v422 = vsel %vm414, %v420, %v421
      %v423 = vrot.slane %v204, 2
      %v424 = vsel %vm414, %v421, %v423
      %v425 = vrot.slane %v205, 2
      %v426 = vrot.slane %v206, 2
      %v427 = vsel %vm414, %v425, %v426
      %v428 = vrot.slane %v207, 2
      %v429 = vsel %vm414, %v426, %v428
      %v430 = vrot.slane %v208, 2
      %v431 = vrot.slane %v209, 2
      %v432 = vsel %vm414, %v430, %v431
      %v433 = vrot.slane %v210, 2
      %v434 = vsel %vm414, %v431, %v433
      %v435 = vrot.slane %v211, 2
      %v436 = vrot.slane %v212, 2
      %v437 = vsel %vm414, %v435, %v436
      %v438 = vrot.slane %v213, 2
      %v439 = vsel %vm414, %v436, %v438
      %v440 = vrot.slane %v214, 2
      %v441 = vrot.slane %v215, 2
      %v442 = vsel %vm414, %v440, %v441
      %v443 = vrot.slane %v216, 2
      %v444 = vsel %vm414, %v441, %v443
      %v445 = vrot.slane %v217, 2
      %v446 = vrot.slane %v218, 2
      %v447 = vsel %vm414, %v445, %v446
      %v448 = vrot.slane %v219, 2
      %v449 = vsel %vm414, %v446, %v448
      %v450 = vrot.slane %v220, 2
      %v451 = vrot.slane %v221, 2
      %v452 = vsel %vm414, %v450, %v451
      %v453 = vrot.slane %v222, 2
      %v454 = vsel %vm414, %v451, %v453
      %v455 = vrot.slane %v223, 2
      %v456 = vrot.slane %v224, 2
      %v457 = vsel %vm414, %v455, %v456
      %v458 = vrot.slane %v225, 2
      %v459 = vsel %vm414, %v456, %v458
      %v460 = vrot.slane %v226, 2
      %v461 = vrot.slane %v227, 2
      %v462 = vsel %vm414, %v460, %v461
      %v463 = vrot.slane %v228, 2
      %v464 = vsel %vm414, %v461, %v463
      %v465 = vrot.slane %v229, 2
      %v466 = vrot.slane %v230, 2
      %v467 = vsel %vm414, %v465, %v466
      %v468 = vrot.slane %v231, 2
      %v469 = vsel %vm414, %v466, %v468
      %v470 = vrot.slane %v232, 2
      %v471 = vrot.slane %v233, 2
      %v472 = vsel %vm414, %v470, %v471
      %v473 = vrot.slane %v234, 2
      %v474 = vsel %vm414, %v471, %v473
      %v475 = vrot.slane %v235, 2
      %v476 = vrot.slane %v236, 2
      %v477 = vsel %vm414, %v475, %v476
      %v478 = vrot.slane %v237, 2
      %v479 = vsel %vm414, %v476, %v478
      %v480 = vrot.slane %v238, 2
      %v481 = vrot.slane %v239, 2
      %v482 = vsel %vm414, %v480, %v481
      %v483 = vrot.slane %v240, 2
      %v484 = vsel %vm414, %v481, %v483
      %v485 = vrot.slane %v241, 2
      %v486 = vrot.slane %v242, 2
      %v487 = vsel %vm414, %v485, %v486
      %v488 = vrot.slane %v243, 2
      %v489 = vsel %vm414, %v486, %v488
      %v490 = vrot.slane %v244, 2
      %v491 = vrot.slane %v245, 2
      %v492 = vsel %vm414, %v490, %v491
      %v493 = vrot.slane %v246, 2
      %v494 = vsel %vm414, %v491, %v493
      %v530 = vrot.slane %v247, 1
      %v531 = vrot.slane %v248, 1
      %v532 = vsel %vm301, %v530, %v531
      %v533 = vrot.slane %v249, 1
      %v534 = vsel %vm301, %v531, %v533
      %v537 = vrot.slane %v247, 2
      %v538 = vrot.slane %v248, 2
      %v539 = vsel %vm414, %v537, %v538
      %v540 = vrot.slane %v249, 2
      %v541 = vsel %vm414, %v538, %v540
      %v547 = vrot.slane %v250, 1
      %v548 = vrot.slane %v251, 1
      %v549 = vsel %vm301, %v547, %v548
      %v550 = vrot.slane %v252, 1
      %v551 = vsel %vm301, %v548, %v550
      %v554 = vrot.slane %v250, 2
      %v555 = vrot.slane %v251, 2
      %v556 = vsel %vm414, %v554, %v555
      %v557 = vrot.slane %v252, 2
      %v558 = vsel %vm414, %v555, %v557
      %v561 = vpack.c.bf16 %v200, %v199
      %v562 = vpack.c.bf16 %v306, %v304
      %v563 = vpack.c.bf16 %v419, %v417
      %v564 = vpack.c.bf16 %v203, %v202
      %v565 = vpack.c.bf16 %v311, %v309
      %v566 = vpack.c.bf16 %v424, %v422
      %v567 = vpack.c.bf16 %v206, %v205
      %v568 = vpack.c.bf16 %v316, %v314
      %v569 = vpack.c.bf16 %v429, %v427
      %v570 = vpack.c.bf16 %v209, %v208
      %v571 = vpack.c.bf16 %v321, %v319
      %v572 = vpack.c.bf16 %v434, %v432
      %v573 = vpack.c.bf16 %v212, %v211
      %v574 = vpack.c.bf16 %v326, %v324
      %v575 = vpack.c.bf16 %v439, %v437
      %v576 = vpack.c.bf16 %v215, %v214
      %v577 = vpack.c.bf16 %v331, %v329
      %v578 = vpack.c.bf16 %v444, %v442
      %v579 = vpack.c.bf16 %v218, %v217
      %v580 = vpack.c.bf16 %v336, %v334
      %v581 = vpack.c.bf16 %v449, %v447
      %v582 = vpack.c.bf16 %v221, %v220
      %v583 = vpack.c.bf16 %v341, %v339
      %v584 = vpack.c.bf16 %v454, %v452
      %v585 = vpack.c.bf16 %v224, %v223
      %v586 = vpack.c.bf16 %v346, %v344
      %v587 = vpack.c.bf16 %v459, %v457
      %v588 = vpack.c.bf16 %v227, %v226
      %v589 = vpack.c.bf16 %v351, %v349
      %v590 = vpack.c.bf16 %v464, %v462
      %v591 = vpack.c.bf16 %v230, %v229
      %v592 = vpack.c.bf16 %v356, %v354
      %v593 = vpack.c.bf16 %v469, %v467
      %v594 = vpack.c.bf16 %v233, %v232
      %v595 = vpack.c.bf16 %v361, %v359
      %v596 = vpack.c.bf16 %v474, %v472
      %v597 = vpack.c.bf16 %v236, %v235
      %v598 = vpack.c.bf16 %v366, %v364
      %v599 = vpack.c.bf16 %v479, %v477
      %v600 = vpack.c.bf16 %v239, %v238
      %v601 = vpack.c.bf16 %v371, %v369
      %v602 = vpack.c.bf16 %v484, %v482
      %v603 = vpack.c.bf16 %v242, %v241
      %v604 = vpack.c.bf16 %v376, %v374
      %v605 = vpack.c.bf16 %v489, %v487
      %v606 = vpack.c.bf16 %v245, %v244
      %v607 = vpack.c.bf16 %v381, %v379
      %v608 = vpack.c.bf16 %v494, %v492
      %v609 = vpack.c.bf16 %v248, %v247
      %v610 = vpack.c.bf16 %v534, %v532
      %v611 = vpack.c.bf16 %v541, %v539
      %v612 = vpack.c.bf16 %v251, %v250
      %v613 = vpack.c.bf16 %v551, %v549
      %v614 = vpack.c.bf16 %v558, %v556
      %v615 = vld [vmem:[%s1] sm:$0xf]
      %v616 = vld [vmem:[%s1 + $0x4] sm:$0xf]
      %v617 = vld [vmem:[%s1 + $0x8] sm:$0xf]
      %v618 = vld [vmem:[%s1 + $0xc] sm:$0xf]
      %v619 = vld [vmem:[%s1 + $0x10] sm:$0xf]
      %v620 = vld [vmem:[%s1 + $0x14] sm:$0xf]
      %v621 = vld [vmem:[%s1 + $0x18] sm:$0xf]
      %v622 = vld [vmem:[%s1 + $0x1c] sm:$0xf]
      %v623 = vld [vmem:[%s1 + $0x20] sm:$0xf]
      %v624 = vld [vmem:[%s1 + $0x24] sm:$0xf]
      %v625 = vld [vmem:[%s1 + $0x28] sm:$0xf]
      %v626 = vld [vmem:[%s1 + $0x2c] sm:$0xf]
      %v627 = vld [vmem:[%s1 + $0x30] sm:$0xf]
      %v628 = vld [vmem:[%s1 + $0x34] sm:$0xf]
      %v629 = vld [vmem:[%s1 + $0x38] sm:$0xf]
      %v630 = vld [vmem:[%s1 + $0x3c] sm:$0xf]
      %v631 = vld [vmem:[%s1 + $0x40] sm:$0xf]
      %v632 = vld [vmem:[%s1 + $0x44] sm:$0xf]
      %v633 = vld [vmem:[%s1 + $0x48] sm:$0xf]
      %v634 = vld [vmem:[%s1 + $0x4c] sm:$0xf]
      %v635 = vld [vmem:[%s1 + $0x50] sm:$0xf]
      %v636 = vld [vmem:[%s1 + $0x54] sm:$0xf]
      %v637 = vld [vmem:[%s1 + $0x58] sm:$0xf]
      %v638 = vld [vmem:[%s1 + $0x5c] sm:$0xf]
      %v639 = vld [vmem:[%s1 + $0x60] sm:$0xf]
      %v640 = vld [vmem:[%s1 + $0x64] sm:$0xf]
      %v641 = vld [vmem:[%s1 + $0x68] sm:$0xf]
      %v642 = vld [vmem:[%s1 + $0x6c] sm:$0xf]
      %v643 = vld [vmem:[%s1 + $0x70] sm:$0xf]
      %v644 = vld [vmem:[%s1 + $0x74] sm:$0xf]
      %v645 = vld [vmem:[%s1 + $0x78] sm:$0xf]
      %v646 = vld [vmem:[%s1 + $0x7c] sm:$0xf]
      %v647 = vld [vmem:[%s1 + $0x80] sm:$0xf]
      %v648 = vld [vmem:[%s1 + $0x84] sm:$0xf]
      %v649 = vld [vmem:[%s1 + $0x88] sm:$0xf]
      %v650 = vld [vmem:[%s1 + $0x8c] sm:$0xf]
      %v651 = vld [vmem:[%s1 + $0x90] sm:$0xf]
      %v652 = vld [vmem:[%s1 + $0x94] sm:$0xf]
      %v653 = vld [vmem:[%s1 + $0x98] sm:$0xf]
      %v654 = vld [vmem:[%s1 + $0x9c] sm:$0xf]
      %v655 = vld [vmem:[%s1 + $0xa0] sm:$0xf]
      %v656 = vld [vmem:[%s1 + $0xa4] sm:$0xf]
      %v657 = vld [vmem:[%s1 + $0xa8] sm:$0xf]
      %v658 = vld [vmem:[%s1 + $0xac] sm:$0xf]
      %v659 = vld [vmem:[%s1 + $0xb0] sm:$0xf]
      %v660 = vld [vmem:[%s1 + $0xb4] sm:$0xf]
      %v661 = vld [vmem:[%s1 + $0xb8] sm:$0xf]
      %v662 = vld [vmem:[%s1 + $0xbc] sm:$0xf]
      %v663 = vld [vmem:[%s1 + $0xc0] sm:$0xf]
      %v664 = vld [vmem:[%s1 + $0xc4] sm:$0xf]
      %v665 = vld [vmem:[%s1 + $0xc8] sm:$0xf]
      %v666 = vld [vmem:[%s1 + $0xcc] sm:$0xf]
      %v667 = vld [vmem:[%s1 + $0xd0] sm:$0xf]
      %v668 = vld [vmem:[%s1 + $0xd4] sm:$0xf]
      %v669 = vld [vmem:[%s1 + $0xd8] sm:$0xf]
      %v670 = vld [vmem:[%s1 + $0xdc] sm:$0xf]
      %v671 = vld [vmem:[%s1 + $0xe0] sm:$0xf]
      %v672 = vld [vmem:[%s1 + $0xe4] sm:$0xf]
      %v673 = vld [vmem:[%s1 + $0xe8] sm:$0xf]
      %v674 = vld [vmem:[%s1 + $0xec] sm:$0xf]
      %v675 = vld [vmem:[%s1 + $0xf0] sm:$0xf]
      %v676 = vld [vmem:[%s1 + $0xf4] sm:$0xf]
      %v677 = vld [vmem:[%s1 + $0xf8] sm:$0xf]
      %v678 = vld [vmem:[%s1 + $0xfc] sm:$0xf]
      %v679 = vld [vmem:[%s1 + $0x100] sm:$0xf]
      %v680 = vld [vmem:[%s1 + $0x104] sm:$0xf]
      %v681 = vld [vmem:[%s1 + $0x108] sm:$0xf]
      %v682 = vld [vmem:[%s1 + $0x10c] sm:$0xf]
      %v683 = vld [vmem:[%s1 + $0x110] sm:$0xf]
      %v684 = vld [vmem:[%s1 + $0x114] sm:$0xf]
      %v685 = vld [vmem:[%s1 + $0x118] sm:$0xf]
      %v686 = vld [vmem:[%s1 + $0x11c] sm:$0xf]
      %v687 = vld [vmem:[%s1 + $0x120] sm:$0xf]
      %v688 = vld [vmem:[%s1 + $0x124] sm:$0xf]
      %v689 = vld [vmem:[%s1 + $0x128] sm:$0xf]
      %v690 = vld [vmem:[%s1 + $0x12c] sm:$0xf]
      %v691 = vld [vmem:[%s1 + $0x130] sm:$0xf]
      %v692 = vld [vmem:[%s1 + $0x134] sm:$0xf]
      %v693 = vld [vmem:[%s1 + $0x138] sm:$0xf]
      %v694 = vld [vmem:[%s1 + $0x13c] sm:$0xf]
      %v695 = vld [vmem:[%s1 + $0x140] sm:$0xf]
      %v696 = vld [vmem:[%s1 + $0x144] sm:$0xf]
      %v697 = vld [vmem:[%s1 + $0x148] sm:$0xf]
      %v698 = vld [vmem:[%s1 + $0x14c] sm:$0xf]
      %v699 = vld [vmem:[%s1 + $0x150] sm:$0xf]
      %v700 = vld [vmem:[%s1 + $0x154] sm:$0xf]
      %v701 = vld [vmem:[%s1 + $0x158] sm:$0xf]
      %v702 = vld [vmem:[%s1 + $0x15c] sm:$0xf]
      %v703 = vld [vmem:[%s1 + $0x160] sm:$0xf]
      %v704 = vld [vmem:[%s1 + $0x164] sm:$0xf]
      %v705 = vld [vmem:[%s1 + $0x168] sm:$0xf]
      %v706 = vld [vmem:[%s1 + $0x16c] sm:$0xf]
      %v707 = vld [vmem:[%s1 + $0x170] sm:$0xf]
      %v708 = vld [vmem:[%s1 + $0x174] sm:$0xf]
      %v709 = vld [vmem:[%s1 + $0x178] sm:$0xf]
      %v710 = vld [vmem:[%s1 + $0x17c] sm:$0xf]
      %v711 = vld [vmem:[%s1 + $0x180] sm:$0xf]
      %v712 = vld [vmem:[%s1 + $0x184] sm:$0xf]
      %v713 = vld [vmem:[%s1 + $0x188] sm:$0xf]
      %v714 = vld [vmem:[%s1 + $0x18c] sm:$0xf]
      %v715 = vld [vmem:[%s1 + $0x190] sm:$0xf]
      %v716 = vld [vmem:[%s1 + $0x194] sm:$0xf]
      %v717 = vld [vmem:[%s1 + $0x198] sm:$0xf]
      %v718 = vld [vmem:[%s1 + $0x19c] sm:$0xf]
      %v719 = vld [vmem:[%s1 + $0x1a0] sm:$0xf]
      %v720 = vld [vmem:[%s1 + $0x1a4] sm:$0xf]
      %v721 = vld [vmem:[%s1 + $0x1a8] sm:$0xf]
      %v722 = vld [vmem:[%s1 + $0x1ac] sm:$0xf]
      %v723 = vld [vmem:[%s1 + $0x1b0] sm:$0xf]
      %v724 = vld [vmem:[%s1 + $0x1b4] sm:$0xf]
      %v725 = vld [vmem:[%s1 + $0x1b8] sm:$0xf]
      %v726 = vld [vmem:[%s1 + $0x1bc] sm:$0xf]
      %v727 = vld [vmem:[%s1 + $0x1c0] sm:$0xf]
      %v728 = vld [vmem:[%s1 + $0x1c4] sm:$0xf]
      %v729 = vld [vmem:[%s1 + $0x1c8] sm:$0xf]
      %v730 = vld [vmem:[%s1 + $0x1cc] sm:$0xf]
      %v731 = vld [vmem:[%s1 + $0x1d0] sm:$0xf]
      %v732 = vld [vmem:[%s1 + $0x1d4] sm:$0xf]
      %v733 = vld [vmem:[%s1 + $0x1d8] sm:$0xf]
      %v734 = vld [vmem:[%s1 + $0x1dc] sm:$0xf]
      %v735 = vld [vmem:[%s1 + $0x1e0] sm:$0xf]
      %v736 = vld [vmem:[%s1 + $0x1e4] sm:$0xf]
      %v737 = vld [vmem:[%s1 + $0x1e8] sm:$0xf]
      %v738 = vld [vmem:[%s1 + $0x1ec] sm:$0xf]
      %v739 = vld [vmem:[%s1 + $0x1f0] sm:$0xf]
      %v740 = vld [vmem:[%s1 + $0x1f4] sm:$0xf]
      %v741 = vld [vmem:[%s1 + $0x1f8] sm:$0xf]
      %v742 = vld [vmem:[%s1 + $0x1fc] sm:$0xf]
      %v743 = vld [vmem:[%s1 + $0x200] sm:$0xf]
      %v744 = vld [vmem:[%s1 + $0x204] sm:$0xf]
      %v745 = vld [vmem:[%s1 + $0x208] sm:$0xf]
      %v746 = vld [vmem:[%s1 + $0x20c] sm:$0xf]
      %v747 = vld [vmem:[%s1 + $0x210] sm:$0xf]
      %v748 = vld [vmem:[%s1 + $0x214] sm:$0xf]
      %v749 = vld [vmem:[%s1 + $0x218] sm:$0xf]
      %v750 = vld [vmem:[%s1 + $0x21c] sm:$0xf]
      %v751 = vld [vmem:[%s1 + $0x220] sm:$0xf]
      %v752 = vld [vmem:[%s1 + $0x224] sm:$0xf]
      %v753 = vld [vmem:[%s1 + $0x228] sm:$0xf]
      %v754 = vld [vmem:[%s1 + $0x22c] sm:$0xf]
      %v755 = vld [vmem:[%s1 + $0x230] sm:$0xf]
      %v756 = vld [vmem:[%s1 + $0x234] sm:$0xf]
      %v757 = vld [vmem:[%s1 + $0x238] sm:$0xf]
      %v758 = vld [vmem:[%s1 + $0x23c] sm:$0xf]
      %v759 = vld [vmem:[%s2] sm:$0x1]
      %v761 = vperm.slane %v759, 0
      %v907 = vunpack.c.l.b16 %v615
      %v908 = vunpack.c.l.b16 %v616
      %v909 = vunpack.c.l.b16 %v617
      %v910 = vunpack.c.l.b16 %v618
      %v911 = vunpack.c.l.b16 %v619
      %v912 = vunpack.c.l.b16 %v620
      %v913 = vunpack.c.l.b16 %v621
      %v914 = vunpack.c.l.b16 %v622
      %v915 = vunpack.c.l.b16 %v623
      %v916 = vunpack.c.l.b16 %v624
      %v917 = vunpack.c.l.b16 %v625
      %v918 = vunpack.c.l.b16 %v626
      %v919 = vunpack.c.l.b16 %v627
      %v920 = vunpack.c.l.b16 %v628
      %v921 = vunpack.c.l.b16 %v629
      %v922 = vunpack.c.l.b16 %v630
      %v923 = vunpack.c.l.b16 %v631
      %v924 = vunpack.c.l.b16 %v632
      %v925 = vunpack.c.l.b16 %v633
      %v926 = vunpack.c.l.b16 %v634
      %v927 = vunpack.c.l.b16 %v635
      %v928 = vunpack.c.l.b16 %v636
      %v929 = vunpack.c.l.b16 %v637
      %v930 = vunpack.c.l.b16 %v638
      %v931 = vunpack.c.l.b16 %v639
      %v932 = vunpack.c.l.b16 %v640
      %v933 = vunpack.c.l.b16 %v641
      %v934 = vunpack.c.l.b16 %v642
      %v935 = vunpack.c.l.b16 %v643
      %v936 = vunpack.c.l.b16 %v644
      %v937 = vunpack.c.l.b16 %v645
      %v938 = vunpack.c.l.b16 %v646
      %v939 = vunpack.c.l.b16 %v647
      %v940 = vunpack.c.l.b16 %v648
      %v941 = vunpack.c.l.b16 %v649
      %v942 = vunpack.c.l.b16 %v650
      %v943 = vunpack.c.l.b16 %v651
      %v944 = vunpack.c.l.b16 %v652
      %v945 = vunpack.c.l.b16 %v653
      %v946 = vunpack.c.l.b16 %v654
      %v947 = vunpack.c.l.b16 %v655
      %v948 = vunpack.c.l.b16 %v656
      %v949 = vunpack.c.l.b16 %v657
      %v950 = vunpack.c.l.b16 %v658
      %v951 = vunpack.c.l.b16 %v659
      %v952 = vunpack.c.l.b16 %v660
      %v953 = vunpack.c.l.b16 %v661
      %v954 = vunpack.c.l.b16 %v662
      %v955 = vunpack.c.l.b16 %v663
      %v956 = vunpack.c.l.b16 %v664
      %v957 = vunpack.c.l.b16 %v665
      %v958 = vunpack.c.l.b16 %v666
      %v959 = vunpack.c.l.b16 %v667
      %v960 = vunpack.c.l.b16 %v668
      %v961 = vunpack.c.l.b16 %v669
      %v962 = vunpack.c.l.b16 %v670
      %v963 = vunpack.c.l.b16 %v671
      %v964 = vunpack.c.l.b16 %v672
      %v965 = vunpack.c.l.b16 %v673
      %v966 = vunpack.c.l.b16 %v674
      %v967 = vunpack.c.l.b16 %v675
      %v968 = vunpack.c.l.b16 %v676
      %v969 = vunpack.c.l.b16 %v677
      %v970 = vunpack.c.l.b16 %v678
      %v971 = vunpack.c.l.b16 %v679
      %v972 = vunpack.c.l.b16 %v680
      %v973 = vunpack.c.l.b16 %v681
      %v974 = vunpack.c.l.b16 %v682
      %v975 = vunpack.c.l.b16 %v683
      %v976 = vunpack.c.l.b16 %v684
      %v977 = vunpack.c.l.b16 %v685
      %v978 = vunpack.c.l.b16 %v686
      %v979 = vunpack.c.l.b16 %v687
      %v980 = vunpack.c.l.b16 %v688
      %v981 = vunpack.c.l.b16 %v689
      %v982 = vunpack.c.l.b16 %v690
      %v983 = vunpack.c.l.b16 %v691
      %v984 = vunpack.c.l.b16 %v692
      %v985 = vunpack.c.l.b16 %v693
      %v986 = vunpack.c.l.b16 %v694
      %v987 = vunpack.c.l.b16 %v695
      %v988 = vunpack.c.l.b16 %v696
      %v989 = vunpack.c.l.b16 %v697
      %v990 = vunpack.c.l.b16 %v698
      %v991 = vunpack.c.l.b16 %v699
      %v992 = vunpack.c.l.b16 %v700
      %v993 = vunpack.c.l.b16 %v701
      %v994 = vunpack.c.l.b16 %v702
      %v995 = vunpack.c.l.b16 %v703
      %v996 = vunpack.c.l.b16 %v704
      %v997 = vunpack.c.l.b16 %v705
      %v998 = vunpack.c.l.b16 %v706
      %v999 = vunpack.c.l.b16 %v707
      %v1000 = vunpack.c.l.b16 %v708
      %v1001 = vunpack.c.l.b16 %v709
      %v1002 = vunpack.c.l.b16 %v710
      %v1003 = vunpack.c.l.b16 %v711
      %v1004 = vunpack.c.l.b16 %v712
      %v1005 = vunpack.c.l.b16 %v713
      %v1006 = vunpack.c.l.b16 %v714
      %v1007 = vunpack.c.l.b16 %v715
      %v1008 = vunpack.c.l.b16 %v716
      %v1009 = vunpack.c.l.b16 %v717
      %v1010 = vunpack.c.l.b16 %v718
      %v1011 = vunpack.c.l.b16 %v719
      %v1012 = vunpack.c.l.b16 %v720
      %v1013 = vunpack.c.l.b16 %v721
      %v1014 = vunpack.c.l.b16 %v722
      %v1015 = vunpack.c.l.b16 %v723
      %v1016 = vunpack.c.l.b16 %v724
      %v1017 = vunpack.c.l.b16 %v725
      %v1018 = vunpack.c.l.b16 %v726
      %v1019 = vunpack.c.l.b16 %v727
      %v1020 = vunpack.c.l.b16 %v728
      %v1021 = vunpack.c.l.b16 %v729
      %v1022 = vunpack.c.l.b16 %v730
      %v1023 = vunpack.c.l.b16 %v731
      %v1024 = vunpack.c.l.b16 %v732
      %v1025 = vunpack.c.l.b16 %v733
      %v1026 = vunpack.c.l.b16 %v734
      %v1027 = vunpack.c.l.b16 %v735
      %v1028 = vunpack.c.l.b16 %v736
      %v1029 = vunpack.c.l.b16 %v737
      %v1030 = vunpack.c.l.b16 %v738
      %v1031 = vunpack.c.l.b16 %v739
      %v1032 = vunpack.c.l.b16 %v740
      %v1033 = vunpack.c.l.b16 %v741
      %v1034 = vunpack.c.l.b16 %v742
      %v1035 = vunpack.c.l.b16 %v743
      %v1036 = vunpack.c.l.b16 %v744
      %v1037 = vunpack.c.l.b16 %v745
      %v1038 = vunpack.c.l.b16 %v746
      %v1039 = vunpack.c.l.b16 %v747
      %v1040 = vunpack.c.l.b16 %v748
      %v1041 = vunpack.c.l.b16 %v749
      %v1042 = vunpack.c.l.b16 %v750
      %v1043 = vunpack.c.l.b16 %v751
      %v1044 = vunpack.c.l.b16 %v752
      %v1045 = vunpack.c.l.b16 %v753
      %v1046 = vunpack.c.l.b16 %v754
      %v1047 = vunpack.c.l.b16 %v755
      %v1048 = vunpack.c.l.b16 %v756
      %v1049 = vunpack.c.l.b16 %v757
      %v1050 = vunpack.c.l.b16 %v758
      %v1051 = vpack.c.b16 %v908, %v907
      %v1052 = vpack.c.b16 %v910, %v909
      %v1053 = vpack.c.b16 %v912, %v911
      %v1054 = vpack.c.b16 %v914, %v913
      %v1055 = vpack.c.b16 %v916, %v915
      %v1056 = vpack.c.b16 %v918, %v917
      %v1057 = vpack.c.b16 %v920, %v919
      %v1058 = vpack.c.b16 %v922, %v921
      %v1059 = vpack.c.b16 %v924, %v923
      %v1060 = vpack.c.b16 %v926, %v925
      %v1061 = vpack.c.b16 %v928, %v927
      %v1062 = vpack.c.b16 %v930, %v929
      %v1063 = vpack.c.b16 %v932, %v931
      %v1064 = vpack.c.b16 %v934, %v933
      %v1065 = vpack.c.b16 %v936, %v935
      %v1066 = vpack.c.b16 %v938, %v937
      %v1067 = vpack.c.b16 %v940, %v939
      %v1068 = vpack.c.b16 %v942, %v941
      %v1069 = vpack.c.b16 %v944, %v943
      %v1070 = vpack.c.b16 %v946, %v945
      %v1071 = vpack.c.b16 %v948, %v947
      %v1072 = vpack.c.b16 %v950, %v949
      %v1073 = vpack.c.b16 %v952, %v951
      %v1074 = vpack.c.b16 %v954, %v953
      %v1075 = vpack.c.b16 %v956, %v955
      %v1076 = vpack.c.b16 %v958, %v957
      %v1077 = vpack.c.b16 %v960, %v959
      %v1078 = vpack.c.b16 %v962, %v961
      %v1079 = vpack.c.b16 %v964, %v963
      %v1080 = vpack.c.b16 %v966, %v965
      %v1081 = vpack.c.b16 %v968, %v967
      %v1082 = vpack.c.b16 %v970, %v969
      %v1083 = vpack.c.b16 %v972, %v971
      %v1084 = vpack.c.b16 %v974, %v973
      %v1085 = vpack.c.b16 %v976, %v975
      %v1086 = vpack.c.b16 %v978, %v977
      %v1087 = vpack.c.b16 %v980, %v979
      %v1088 = vpack.c.b16 %v982, %v981
      %v1089 = vpack.c.b16 %v984, %v983
      %v1090 = vpack.c.b16 %v986, %v985
      %v1091 = vpack.c.b16 %v988, %v987
      %v1092 = vpack.c.b16 %v990, %v989
      %v1093 = vpack.c.b16 %v992, %v991
      %v1094 = vpack.c.b16 %v994, %v993
      %v1095 = vpack.c.b16 %v996, %v995
      %v1096 = vpack.c.b16 %v998, %v997
      %v1097 = vpack.c.b16 %v1000, %v999
      %v1098 = vpack.c.b16 %v1002, %v1001
      %v1099 = vpack.c.b16 %v1004, %v1003
      %v1100 = vpack.c.b16 %v1006, %v1005
      %v1101 = vpack.c.b16 %v1008, %v1007
      %v1102 = vpack.c.b16 %v1010, %v1009
      %v1103 = vpack.c.b16 %v1012, %v1011
      %v1104 = vpack.c.b16 %v1014, %v1013
      %v1105 = vpack.c.b16 %v1016, %v1015
      %v1106 = vpack.c.b16 %v1018, %v1017
      %v1107 = vpack.c.b16 %v1020, %v1019
      %v1108 = vpack.c.b16 %v1022, %v1021
      %v1109 = vpack.c.b16 %v1024, %v1023
      %v1110 = vpack.c.b16 %v1026, %v1025
      %v1111 = vpack.c.b16 %v1028, %v1027
      %v1112 = vpack.c.b16 %v1030, %v1029
      %v1113 = vpack.c.b16 %v1032, %v1031
      %v1114 = vpack.c.b16 %v1034, %v1033
      %v1115 = vpack.c.b16 %v1036, %v1035
      %v1116 = vpack.c.b16 %v1038, %v1037
      %v1117 = vpack.c.b16 %v1040, %v1039
      %v1118 = vpack.c.b16 %v1042, %v1041
      %v1119 = vpack.c.b16 %v1044, %v1043
      %v1120 = vpack.c.b16 %v1046, %v1045
      %v1121 = vpack.c.b16 %v1048, %v1047
      %v1122 = vpack.c.b16 %v1050, %v1049
      %1195 = vmatpush.bf16.msra.mxu0 %v1058
      %1196 = vmatpush.bf16.msra.mxu0 %v1057
      %1197 = vmatpush.bf16.msra.mxu0 %v1056
      %1198 = vmatpush.bf16.msra.mxu0 %v1055
      %1199 = vmatpush.bf16.msra.mxu0 %v1054
      %1200 = vmatpush.bf16.msra.mxu0 %v1053
      %1201 = vmatpush.bf16.msra.mxu0 %v1052
      %1202 = vmatpush.bf16.msra.mxu0 %v1051
      %1203 = vmatmul.bf16.gmra.mxu0 %v561
      %v1204 = vpop.f32.mrf.mxu0
      %v1205 = vadd.f32 %v761, %v1204
      %v1206 = vpop.f32.mrf.mxu0
      %v1207 = vadd.f32 %v761, %v1206
      %1208 = vmatmul.bf16.gmra.mxu0 %v564
      %v1209 = vpop.f32.mrf.mxu0
      %v1210 = vadd.f32 %v761, %v1209
      %v1211 = vpop.f32.mrf.mxu0
      %v1212 = vadd.f32 %v761, %v1211
      %1213 = vmatmul.bf16.gmra.mxu0 %v567
      %v1214 = vpop.f32.mrf.mxu0
      %v1215 = vadd.f32 %v761, %v1214
      %v1216 = vpop.f32.mrf.mxu0
      %v1217 = vadd.f32 %v761, %v1216
      %1218 = vmatmul.bf16.gmra.mxu0 %v570
      %v1219 = vpop.f32.mrf.mxu0
      %v1220 = vadd.f32 %v761, %v1219
      %v1221 = vpop.f32.mrf.mxu0
      %v1222 = vadd.f32 %v761, %v1221
      %1223 = vmatmul.bf16.gmra.mxu0 %v573
      %v1224 = vpop.f32.mrf.mxu0
      %v1225 = vadd.f32 %v761, %v1224
      %v1226 = vpop.f32.mrf.mxu0
      %v1227 = vadd.f32 %v761, %v1226
      %1228 = vmatmul.bf16.gmra.mxu0 %v576
      %v1229 = vpop.f32.mrf.mxu0
      %v1230 = vadd.f32 %v761, %v1229
      %v1231 = vpop.f32.mrf.mxu0
      %v1232 = vadd.f32 %v761, %v1231
      %1233 = vmatmul.bf16.gmra.mxu0 %v579
      %v1234 = vpop.f32.mrf.mxu0
      %v1235 = vadd.f32 %v761, %v1234
      %v1236 = vpop.f32.mrf.mxu0
      %v1237 = vadd.f32 %v761, %v1236
      %1238 = vmatmul.bf16.gmra.mxu0 %v582
      %v1239 = vpop.f32.mrf.mxu0
      %v1240 = vadd.f32 %v761, %v1239
      %v1241 = vpop.f32.mrf.mxu0
      %v1242 = vadd.f32 %v761, %v1241
      %1243 = vmatmul.bf16.gmra.mxu0 %v585
      %v1244 = vpop.f32.mrf.mxu0
      %v1245 = vadd.f32 %v761, %v1244
      %v1246 = vpop.f32.mrf.mxu0
      %v1247 = vadd.f32 %v761, %v1246
      %1248 = vmatmul.bf16.gmra.mxu0 %v588
      %v1249 = vpop.f32.mrf.mxu0
      %v1250 = vadd.f32 %v761, %v1249
      %v1251 = vpop.f32.mrf.mxu0
      %v1252 = vadd.f32 %v761, %v1251
      %1253 = vmatmul.bf16.gmra.mxu0 %v591
      %v1254 = vpop.f32.mrf.mxu0
      %v1255 = vadd.f32 %v761, %v1254
      %v1256 = vpop.f32.mrf.mxu0
      %v1257 = vadd.f32 %v761, %v1256
      %1258 = vmatmul.bf16.gmra.mxu0 %v594
      %v1259 = vpop.f32.mrf.mxu0
      %v1260 = vadd.f32 %v761, %v1259
      %v1261 = vpop.f32.mrf.mxu0
      %v1262 = vadd.f32 %v761, %v1261
      %1263 = vmatmul.bf16.gmra.mxu0 %v597
      %v1264 = vpop.f32.mrf.mxu0
      %v1265 = vadd.f32 %v761, %v1264
      %v1266 = vpop.f32.mrf.mxu0
      %v1267 = vadd.f32 %v761, %v1266
      %1268 = vmatmul.bf16.gmra.mxu0 %v600
      %v1269 = vpop.f32.mrf.mxu0
      %v1270 = vadd.f32 %v761, %v1269
      %v1271 = vpop.f32.mrf.mxu0
      %v1272 = vadd.f32 %v761, %v1271
      %1273 = vmatmul.bf16.gmra.mxu0 %v603
      %v1274 = vpop.f32.mrf.mxu0
      %v1275 = vadd.f32 %v761, %v1274
      %v1276 = vpop.f32.mrf.mxu0
      %v1277 = vadd.f32 %v761, %v1276
      %1278 = vmatmul.bf16.gmra.mxu0 %v606
      %v1279 = vpop.f32.mrf.mxu0
      %v1280 = vadd.f32 %v761, %v1279
      %v1281 = vpop.f32.mrf.mxu0
      %v1282 = vadd.f32 %v761, %v1281
      %1283 = vdwg.mxu0
      %1284 = vmatpush.bf16.msra.mxu0 %v1066
      %1285 = vmatpush.bf16.msra.mxu0 %v1065
      %1286 = vmatpush.bf16.msra.mxu0 %v1064
      %1287 = vmatpush.bf16.msra.mxu0 %v1063
      %1288 = vmatpush.bf16.msra.mxu0 %v1062
      %1289 = vmatpush.bf16.msra.mxu0 %v1061
      %1290 = vmatpush.bf16.msra.mxu0 %v1060
      %1291 = vmatpush.bf16.msra.mxu0 %v1059
      %1292 = vmatmul.bf16.gmra.mxu0 %v562
      %v1293 = vpop.f32.mrf.mxu0
      %v1294 = vadd.f32 %v1205, %v1293
      %v1295 = vpop.f32.mrf.mxu0
      %v1296 = vadd.f32 %v1207, %v1295
      %1297 = vmatmul.bf16.gmra.mxu0 %v565
      %v1298 = vpop.f32.mrf.mxu0
      %v1299 = vadd.f32 %v1210, %v1298
      %v1300 = vpop.f32.mrf.mxu0
      %v1301 = vadd.f32 %v1212, %v1300
      %1302 = vmatmul.bf16.gmra.mxu0 %v568
      %v1303 = vpop.f32.mrf.mxu0
      %v1304 = vadd.f32 %v1215, %v1303
      %v1305 = vpop.f32.mrf.mxu0
      %v1306 = vadd.f32 %v1217, %v1305
      %1307 = vmatmul.bf16.gmra.mxu0 %v571
      %v1308 = vpop.f32.mrf.mxu0
      %v1309 = vadd.f32 %v1220, %v1308
      %v1310 = vpop.f32.mrf.mxu0
      %v1311 = vadd.f32 %v1222, %v1310
      %1312 = vmatmul.bf16.gmra.mxu0 %v574
      %v1313 = vpop.f32.mrf.mxu0
      %v1314 = vadd.f32 %v1225, %v1313
      %v1315 = vpop.f32.mrf.mxu0
      %v1316 = vadd.f32 %v1227, %v1315
      %1317 = vmatmul.bf16.gmra.mxu0 %v577
      %v1318 = vpop.f32.mrf.mxu0
      %v1319 = vadd.f32 %v1230, %v1318
      %v1320 = vpop.f32.mrf.mxu0
      %v1321 = vadd.f32 %v1232, %v1320
      %1322 = vmatmul.bf16.gmra.mxu0 %v580
      %v1323 = vpop.f32.mrf.mxu0
      %v1324 = vadd.f32 %v1235, %v1323
      %v1325 = vpop.f32.mrf.mxu0
      %v1326 = vadd.f32 %v1237, %v1325
      %1327 = vmatmul.bf16.gmra.mxu0 %v583
      %v1328 = vpop.f32.mrf.mxu0
      %v1329 = vadd.f32 %v1240, %v1328
      %v1330 = vpop.f32.mrf.mxu0
      %v1331 = vadd.f32 %v1242, %v1330
      %1332 = vmatmul.bf16.gmra.mxu0 %v586
      %v1333 = vpop.f32.mrf.mxu0
      %v1334 = vadd.f32 %v1245, %v1333
      %v1335 = vpop.f32.mrf.mxu0
      %v1336 = vadd.f32 %v1247, %v1335
      %1337 = vmatmul.bf16.gmra.mxu0 %v589
      %v1338 = vpop.f32.mrf.mxu0
      %v1339 = vadd.f32 %v1250, %v1338
      %v1340 = vpop.f32.mrf.mxu0
      %v1341 = vadd.f32 %v1252, %v1340
      %1342 = vmatmul.bf16.gmra.mxu0 %v592
      %v1343 = vpop.f32.mrf.mxu0
      %v1344 = vadd.f32 %v1255, %v1343
      %v1345 = vpop.f32.mrf.mxu0
      %v1346 = vadd.f32 %v1257, %v1345
      %1347 = vmatmul.bf16.gmra.mxu0 %v595
      %v1348 = vpop.f32.mrf.mxu0
      %v1349 = vadd.f32 %v1260, %v1348
      %v1350 = vpop.f32.mrf.mxu0
      %v1351 = vadd.f32 %v1262, %v1350
      %1352 = vmatmul.bf16.gmra.mxu0 %v598
      %v1353 = vpop.f32.mrf.mxu0
      %v1354 = vadd.f32 %v1265, %v1353
      %v1355 = vpop.f32.mrf.mxu0
      %v1356 = vadd.f32 %v1267, %v1355
      %1357 = vmatmul.bf16.gmra.mxu0 %v601
      %v1358 = vpop.f32.mrf.mxu0
      %v1359 = vadd.f32 %v1270, %v1358
      %v1360 = vpop.f32.mrf.mxu0
      %v1361 = vadd.f32 %v1272, %v1360
      %1362 = vmatmul.bf16.gmra.mxu0 %v604
      %v1363 = vpop.f32.mrf.mxu0
      %v1364 = vadd.f32 %v1275, %v1363
      %v1365 = vpop.f32.mrf.mxu0
      %v1366 = vadd.f32 %v1277, %v1365
      %1367 = vmatmul.bf16.gmra.mxu0 %v607
      %v1368 = vpop.f32.mrf.mxu0
      %v1369 = vadd.f32 %v1280, %v1368
      %v1370 = vpop.f32.mrf.mxu0
      %v1371 = vadd.f32 %v1282, %v1370
      %1372 = vdwg.mxu0
      %1373 = vmatpush.bf16.msra.mxu0 %v1074
      %1374 = vmatpush.bf16.msra.mxu0 %v1073
      %1375 = vmatpush.bf16.msra.mxu0 %v1072
      %1376 = vmatpush.bf16.msra.mxu0 %v1071
      %1377 = vmatpush.bf16.msra.mxu0 %v1070
      %1378 = vmatpush.bf16.msra.mxu0 %v1069
      %1379 = vmatpush.bf16.msra.mxu0 %v1068
      %1380 = vmatpush.bf16.msra.mxu0 %v1067
      %1381 = vmatmul.bf16.gmra.mxu0 %v563
      %v1382 = vpop.f32.mrf.mxu0
      %v1383 = vadd.f32 %v1294, %v1382
      %v1384 = vpop.f32.mrf.mxu0
      %v1385 = vadd.f32 %v1296, %v1384
      %1386 = vmatmul.bf16.gmra.mxu0 %v566
      %v1387 = vpop.f32.mrf.mxu0
      %v1388 = vadd.f32 %v1299, %v1387
      %v1389 = vpop.f32.mrf.mxu0
      %v1390 = vadd.f32 %v1301, %v1389
      %1391 = vmatmul.bf16.gmra.mxu0 %v569
      %v1392 = vpop.f32.mrf.mxu0
      %v1393 = vadd.f32 %v1304, %v1392
      %v1394 = vpop.f32.mrf.mxu0
      %v1395 = vadd.f32 %v1306, %v1394
      %1396 = vmatmul.bf16.gmra.mxu0 %v572
      %v1397 = vpop.f32.mrf.mxu0
      %v1398 = vadd.f32 %v1309, %v1397
      %v1399 = vpop.f32.mrf.mxu0
      %v1400 = vadd.f32 %v1311, %v1399
      %1401 = vmatmul.bf16.gmra.mxu0 %v575
      %v1402 = vpop.f32.mrf.mxu0
      %v1403 = vadd.f32 %v1314, %v1402
      %v1404 = vpop.f32.mrf.mxu0
      %v1405 = vadd.f32 %v1316, %v1404
      %1406 = vmatmul.bf16.gmra.mxu0 %v578
      %v1407 = vpop.f32.mrf.mxu0
      %v1408 = vadd.f32 %v1319, %v1407
      %v1409 = vpop.f32.mrf.mxu0
      %v1410 = vadd.f32 %v1321, %v1409
      %1411 = vmatmul.bf16.gmra.mxu0 %v581
      %v1412 = vpop.f32.mrf.mxu0
      %v1413 = vadd.f32 %v1324, %v1412
      %v1414 = vpop.f32.mrf.mxu0
      %v1415 = vadd.f32 %v1326, %v1414
      %1416 = vmatmul.bf16.gmra.mxu0 %v584
      %v1417 = vpop.f32.mrf.mxu0
      %v1418 = vadd.f32 %v1329, %v1417
      %v1419 = vpop.f32.mrf.mxu0
      %v1420 = vadd.f32 %v1331, %v1419
      %1421 = vmatmul.bf16.gmra.mxu0 %v587
      %v1422 = vpop.f32.mrf.mxu0
      %v1423 = vadd.f32 %v1334, %v1422
      %v1424 = vpop.f32.mrf.mxu0
      %v1425 = vadd.f32 %v1336, %v1424
      %1426 = vmatmul.bf16.gmra.mxu0 %v590
      %v1427 = vpop.f32.mrf.mxu0
      %v1428 = vadd.f32 %v1339, %v1427
      %v1429 = vpop.f32.mrf.mxu0
      %v1430 = vadd.f32 %v1341, %v1429
      %1431 = vmatmul.bf16.gmra.mxu0 %v593
      %v1432 = vpop.f32.mrf.mxu0
      %v1433 = vadd.f32 %v1344, %v1432
      %v1434 = vpop.f32.mrf.mxu0
      %v1435 = vadd.f32 %v1346, %v1434
      %1436 = vmatmul.bf16.gmra.mxu0 %v596
      %v1437 = vpop.f32.mrf.mxu0
      %v1438 = vadd.f32 %v1349, %v1437
      %v1439 = vpop.f32.mrf.mxu0
      %v1440 = vadd.f32 %v1351, %v1439
      %1441 = vmatmul.bf16.gmra.mxu0 %v599
      %v1442 = vpop.f32.mrf.mxu0
      %v1443 = vadd.f32 %v1354, %v1442
      %v1444 = vpop.f32.mrf.mxu0
      %v1445 = vadd.f32 %v1356, %v1444
      %1446 = vmatmul.bf16.gmra.mxu0 %v602
      %v1447 = vpop.f32.mrf.mxu0
      %v1448 = vadd.f32 %v1359, %v1447
      %v1449 = vpop.f32.mrf.mxu0
      %v1450 = vadd.f32 %v1361, %v1449
      %1451 = vmatmul.bf16.gmra.mxu0 %v605
      %v1452 = vpop.f32.mrf.mxu0
      %v1453 = vadd.f32 %v1364, %v1452
      %v1454 = vpop.f32.mrf.mxu0
      %v1455 = vadd.f32 %v1366, %v1454
      %1456 = vmatmul.bf16.gmra.mxu0 %v608
      %v1457 = vpop.f32.mrf.mxu0
      %v1458 = vadd.f32 %v1369, %v1457
      %v1459 = vpop.f32.mrf.mxu0
      %v1460 = vadd.f32 %v1371, %v1459
      %1461 = vdwg.mxu0
      %1462 = vmatpush.bf16.msra.mxu0 %v1082
      %1463 = vmatpush.bf16.msra.mxu0 %v1081
      %1464 = vmatpush.bf16.msra.mxu0 %v1080
      %1465 = vmatpush.bf16.msra.mxu0 %v1079
      %1466 = vmatpush.bf16.msra.mxu0 %v1078
      %1467 = vmatpush.bf16.msra.mxu0 %v1077
      %1468 = vmatpush.bf16.msra.mxu0 %v1076
      %1469 = vmatpush.bf16.msra.mxu0 %v1075
      %1470 = vmatmul.bf16.gmra.mxu0 %v564
      %v1471 = vpop.f32.mrf.mxu0
      %v1472 = vadd.f32 %v1383, %v1471
      %v1473 = vpop.f32.mrf.mxu0
      %v1474 = vadd.f32 %v1385, %v1473
      %1475 = vmatmul.bf16.gmra.mxu0 %v567
      %v1476 = vpop.f32.mrf.mxu0
      %v1477 = vadd.f32 %v1388, %v1476
      %v1478 = vpop.f32.mrf.mxu0
      %v1479 = vadd.f32 %v1390, %v1478
      %1480 = vmatmul.bf16.gmra.mxu0 %v570
      %v1481 = vpop.f32.mrf.mxu0
      %v1482 = vadd.f32 %v1393, %v1481
      %v1483 = vpop.f32.mrf.mxu0
      %v1484 = vadd.f32 %v1395, %v1483
      %1485 = vmatmul.bf16.gmra.mxu0 %v573
      %v1486 = vpop.f32.mrf.mxu0
      %v1487 = vadd.f32 %v1398, %v1486
      %v1488 = vpop.f32.mrf.mxu0
      %v1489 = vadd.f32 %v1400, %v1488
      %1490 = vmatmul.bf16.gmra.mxu0 %v576
      %v1491 = vpop.f32.mrf.mxu0
      %v1492 = vadd.f32 %v1403, %v1491
      %v1493 = vpop.f32.mrf.mxu0
      %v1494 = vadd.f32 %v1405, %v1493
      %1495 = vmatmul.bf16.gmra.mxu0 %v579
      %v1496 = vpop.f32.mrf.mxu0
      %v1497 = vadd.f32 %v1408, %v1496
      %v1498 = vpop.f32.mrf.mxu0
      %v1499 = vadd.f32 %v1410, %v1498
      %1500 = vmatmul.bf16.gmra.mxu0 %v582
      %v1501 = vpop.f32.mrf.mxu0
      %v1502 = vadd.f32 %v1413, %v1501
      %v1503 = vpop.f32.mrf.mxu0
      %v1504 = vadd.f32 %v1415, %v1503
      %1505 = vmatmul.bf16.gmra.mxu0 %v585
      %v1506 = vpop.f32.mrf.mxu0
      %v1507 = vadd.f32 %v1418, %v1506
      %v1508 = vpop.f32.mrf.mxu0
      %v1509 = vadd.f32 %v1420, %v1508
      %1510 = vmatmul.bf16.gmra.mxu0 %v588
      %v1511 = vpop.f32.mrf.mxu0
      %v1512 = vadd.f32 %v1423, %v1511
      %v1513 = vpop.f32.mrf.mxu0
      %v1514 = vadd.f32 %v1425, %v1513
      %1515 = vmatmul.bf16.gmra.mxu0 %v591
      %v1516 = vpop.f32.mrf.mxu0
      %v1517 = vadd.f32 %v1428, %v1516
      %v1518 = vpop.f32.mrf.mxu0
      %v1519 = vadd.f32 %v1430, %v1518
      %1520 = vmatmul.bf16.gmra.mxu0 %v594
      %v1521 = vpop.f32.mrf.mxu0
      %v1522 = vadd.f32 %v1433, %v1521
      %v1523 = vpop.f32.mrf.mxu0
      %v1524 = vadd.f32 %v1435, %v1523
      %1525 = vmatmul.bf16.gmra.mxu0 %v597
      %v1526 = vpop.f32.mrf.mxu0
      %v1527 = vadd.f32 %v1438, %v1526
      %v1528 = vpop.f32.mrf.mxu0
      %v1529 = vadd.f32 %v1440, %v1528
      %1530 = vmatmul.bf16.gmra.mxu0 %v600
      %v1531 = vpop.f32.mrf.mxu0
      %v1532 = vadd.f32 %v1443, %v1531
      %v1533 = vpop.f32.mrf.mxu0
      %v1534 = vadd.f32 %v1445, %v1533
      %1535 = vmatmul.bf16.gmra.mxu0 %v603
      %v1536 = vpop.f32.mrf.mxu0
      %v1537 = vadd.f32 %v1448, %v1536
      %v1538 = vpop.f32.mrf.mxu0
      %v1539 = vadd.f32 %v1450, %v1538
      %1540 = vmatmul.bf16.gmra.mxu0 %v606
      %v1541 = vpop.f32.mrf.mxu0
      %v1542 = vadd.f32 %v1453, %v1541
      %v1543 = vpop.f32.mrf.mxu0
      %v1544 = vadd.f32 %v1455, %v1543
      %1545 = vmatmul.bf16.gmra.mxu0 %v609
      %v1546 = vpop.f32.mrf.mxu0
      %v1547 = vadd.f32 %v1458, %v1546
      %v1548 = vpop.f32.mrf.mxu0
      %v1549 = vadd.f32 %v1460, %v1548
      %1550 = vdwg.mxu0
      %1551 = vmatpush.bf16.msra.mxu0 %v1090
      %1552 = vmatpush.bf16.msra.mxu0 %v1089
      %1553 = vmatpush.bf16.msra.mxu0 %v1088
      %1554 = vmatpush.bf16.msra.mxu0 %v1087
      %1555 = vmatpush.bf16.msra.mxu0 %v1086
      %1556 = vmatpush.bf16.msra.mxu0 %v1085
      %1557 = vmatpush.bf16.msra.mxu0 %v1084
      %1558 = vmatpush.bf16.msra.mxu0 %v1083
      %1559 = vmatmul.bf16.gmra.mxu0 %v565
      %v1560 = vpop.f32.mrf.mxu0
      %v1561 = vadd.f32 %v1472, %v1560
      %v1562 = vpop.f32.mrf.mxu0
      %v1563 = vadd.f32 %v1474, %v1562
      %1564 = vmatmul.bf16.gmra.mxu0 %v568
      %v1565 = vpop.f32.mrf.mxu0
      %v1566 = vadd.f32 %v1477, %v1565
      %v1567 = vpop.f32.mrf.mxu0
      %v1568 = vadd.f32 %v1479, %v1567
      %1569 = vmatmul.bf16.gmra.mxu0 %v571
      %v1570 = vpop.f32.mrf.mxu0
      %v1571 = vadd.f32 %v1482, %v1570
      %v1572 = vpop.f32.mrf.mxu0
      %v1573 = vadd.f32 %v1484, %v1572
      %1574 = vmatmul.bf16.gmra.mxu0 %v574
      %v1575 = vpop.f32.mrf.mxu0
      %v1576 = vadd.f32 %v1487, %v1575
      %v1577 = vpop.f32.mrf.mxu0
      %v1578 = vadd.f32 %v1489, %v1577
      %1579 = vmatmul.bf16.gmra.mxu0 %v577
      %v1580 = vpop.f32.mrf.mxu0
      %v1581 = vadd.f32 %v1492, %v1580
      %v1582 = vpop.f32.mrf.mxu0
      %v1583 = vadd.f32 %v1494, %v1582
      %1584 = vmatmul.bf16.gmra.mxu0 %v580
      %v1585 = vpop.f32.mrf.mxu0
      %v1586 = vadd.f32 %v1497, %v1585
      %v1587 = vpop.f32.mrf.mxu0
      %v1588 = vadd.f32 %v1499, %v1587
      %1589 = vmatmul.bf16.gmra.mxu0 %v583
      %v1590 = vpop.f32.mrf.mxu0
      %v1591 = vadd.f32 %v1502, %v1590
      %v1592 = vpop.f32.mrf.mxu0
      %v1593 = vadd.f32 %v1504, %v1592
      %1594 = vmatmul.bf16.gmra.mxu0 %v586
      %v1595 = vpop.f32.mrf.mxu0
      %v1596 = vadd.f32 %v1507, %v1595
      %v1597 = vpop.f32.mrf.mxu0
      %v1598 = vadd.f32 %v1509, %v1597
      %1599 = vmatmul.bf16.gmra.mxu0 %v589
      %v1600 = vpop.f32.mrf.mxu0
      %v1601 = vadd.f32 %v1512, %v1600
      %v1602 = vpop.f32.mrf.mxu0
      %v1603 = vadd.f32 %v1514, %v1602
      %1604 = vmatmul.bf16.gmra.mxu0 %v592
      %v1605 = vpop.f32.mrf.mxu0
      %v1606 = vadd.f32 %v1517, %v1605
      %v1607 = vpop.f32.mrf.mxu0
      %v1608 = vadd.f32 %v1519, %v1607
      %1609 = vmatmul.bf16.gmra.mxu0 %v595
      %v1610 = vpop.f32.mrf.mxu0
      %v1611 = vadd.f32 %v1522, %v1610
      %v1612 = vpop.f32.mrf.mxu0
      %v1613 = vadd.f32 %v1524, %v1612
      %1614 = vmatmul.bf16.gmra.mxu0 %v598
      %v1615 = vpop.f32.mrf.mxu0
      %v1616 = vadd.f32 %v1527, %v1615
      %v1617 = vpop.f32.mrf.mxu0
      %v1618 = vadd.f32 %v1529, %v1617
      %1619 = vmatmul.bf16.gmra.mxu0 %v601
      %v1620 = vpop.f32.mrf.mxu0
      %v1621 = vadd.f32 %v1532, %v1620
      %v1622 = vpop.f32.mrf.mxu0
      %v1623 = vadd.f32 %v1534, %v1622
      %1624 = vmatmul.bf16.gmra.mxu0 %v604
      %v1625 = vpop.f32.mrf.mxu0
      %v1626 = vadd.f32 %v1537, %v1625
      %v1627 = vpop.f32.mrf.mxu0
      %v1628 = vadd.f32 %v1539, %v1627
      %1629 = vmatmul.bf16.gmra.mxu0 %v607
      %v1630 = vpop.f32.mrf.mxu0
      %v1631 = vadd.f32 %v1542, %v1630
      %v1632 = vpop.f32.mrf.mxu0
      %v1633 = vadd.f32 %v1544, %v1632
      %1634 = vmatmul.bf16.gmra.mxu0 %v610
      %v1635 = vpop.f32.mrf.mxu0
      %v1636 = vadd.f32 %v1547, %v1635
      %v1637 = vpop.f32.mrf.mxu0
      %v1638 = vadd.f32 %v1549, %v1637
      %1639 = vdwg.mxu0
      %1640 = vmatpush.bf16.msra.mxu0 %v1098
      %1641 = vmatpush.bf16.msra.mxu0 %v1097
      %1642 = vmatpush.bf16.msra.mxu0 %v1096
      %1643 = vmatpush.bf16.msra.mxu0 %v1095
      %1644 = vmatpush.bf16.msra.mxu0 %v1094
      %1645 = vmatpush.bf16.msra.mxu0 %v1093
      %1646 = vmatpush.bf16.msra.mxu0 %v1092
      %1647 = vmatpush.bf16.msra.mxu0 %v1091
      %1648 = vmatmul.bf16.gmra.mxu0 %v566
      %v1649 = vpop.f32.mrf.mxu0
      %v1650 = vadd.f32 %v1561, %v1649
      %v1651 = vpop.f32.mrf.mxu0
      %v1652 = vadd.f32 %v1563, %v1651
      %1653 = vmatmul.bf16.gmra.mxu0 %v569
      %v1654 = vpop.f32.mrf.mxu0
      %v1655 = vadd.f32 %v1566, %v1654
      %v1656 = vpop.f32.mrf.mxu0
      %v1657 = vadd.f32 %v1568, %v1656
      %1658 = vmatmul.bf16.gmra.mxu0 %v572
      %v1659 = vpop.f32.mrf.mxu0
      %v1660 = vadd.f32 %v1571, %v1659
      %v1661 = vpop.f32.mrf.mxu0
      %v1662 = vadd.f32 %v1573, %v1661
      %1663 = vmatmul.bf16.gmra.mxu0 %v575
      %v1664 = vpop.f32.mrf.mxu0
      %v1665 = vadd.f32 %v1576, %v1664
      %v1666 = vpop.f32.mrf.mxu0
      %v1667 = vadd.f32 %v1578, %v1666
      %1668 = vmatmul.bf16.gmra.mxu0 %v578
      %v1669 = vpop.f32.mrf.mxu0
      %v1670 = vadd.f32 %v1581, %v1669
      %v1671 = vpop.f32.mrf.mxu0
      %v1672 = vadd.f32 %v1583, %v1671
      %1673 = vmatmul.bf16.gmra.mxu0 %v581
      %v1674 = vpop.f32.mrf.mxu0
      %v1675 = vadd.f32 %v1586, %v1674
      %v1676 = vpop.f32.mrf.mxu0
      %v1677 = vadd.f32 %v1588, %v1676
      %1678 = vmatmul.bf16.gmra.mxu0 %v584
      %v1679 = vpop.f32.mrf.mxu0
      %v1680 = vadd.f32 %v1591, %v1679
      %v1681 = vpop.f32.mrf.mxu0
      %v1682 = vadd.f32 %v1593, %v1681
      %1683 = vmatmul.bf16.gmra.mxu0 %v587
      %v1684 = vpop.f32.mrf.mxu0
      %v1685 = vadd.f32 %v1596, %v1684
      %v1686 = vpop.f32.mrf.mxu0
      %v1687 = vadd.f32 %v1598, %v1686
      %1688 = vmatmul.bf16.gmra.mxu0 %v590
      %v1689 = vpop.f32.mrf.mxu0
      %v1690 = vadd.f32 %v1601, %v1689
      %v1691 = vpop.f32.mrf.mxu0
      %v1692 = vadd.f32 %v1603, %v1691
      %1693 = vmatmul.bf16.gmra.mxu0 %v593
      %v1694 = vpop.f32.mrf.mxu0
      %v1695 = vadd.f32 %v1606, %v1694
      %v1696 = vpop.f32.mrf.mxu0
      %v1697 = vadd.f32 %v1608, %v1696
      %1698 = vmatmul.bf16.gmra.mxu0 %v596
      %v1699 = vpop.f32.mrf.mxu0
      %v1700 = vadd.f32 %v1611, %v1699
      %v1701 = vpop.f32.mrf.mxu0
      %v1702 = vadd.f32 %v1613, %v1701
      %1703 = vmatmul.bf16.gmra.mxu0 %v599
      %v1704 = vpop.f32.mrf.mxu0
      %v1705 = vadd.f32 %v1616, %v1704
      %v1706 = vpop.f32.mrf.mxu0
      %v1707 = vadd.f32 %v1618, %v1706
      %1708 = vmatmul.bf16.gmra.mxu0 %v602
      %v1709 = vpop.f32.mrf.mxu0
      %v1710 = vadd.f32 %v1621, %v1709
      %v1711 = vpop.f32.mrf.mxu0
      %v1712 = vadd.f32 %v1623, %v1711
      %1713 = vmatmul.bf16.gmra.mxu0 %v605
      %v1714 = vpop.f32.mrf.mxu0
      %v1715 = vadd.f32 %v1626, %v1714
      %v1716 = vpop.f32.mrf.mxu0
      %v1717 = vadd.f32 %v1628, %v1716
      %1718 = vmatmul.bf16.gmra.mxu0 %v608
      %v1719 = vpop.f32.mrf.mxu0
      %v1720 = vadd.f32 %v1631, %v1719
      %v1721 = vpop.f32.mrf.mxu0
      %v1722 = vadd.f32 %v1633, %v1721
      %1723 = vmatmul.bf16.gmra.mxu0 %v611
      %v1724 = vpop.f32.mrf.mxu0
      %v1725 = vadd.f32 %v1636, %v1724
      %v1726 = vpop.f32.mrf.mxu0
      %v1727 = vadd.f32 %v1638, %v1726
      %1728 = vdwg.mxu0
      %1729 = vmatpush.bf16.msra.mxu0 %v1106
      %1730 = vmatpush.bf16.msra.mxu0 %v1105
      %1731 = vmatpush.bf16.msra.mxu0 %v1104
      %1732 = vmatpush.bf16.msra.mxu0 %v1103
      %1733 = vmatpush.bf16.msra.mxu0 %v1102
      %1734 = vmatpush.bf16.msra.mxu0 %v1101
      %1735 = vmatpush.bf16.msra.mxu0 %v1100
      %1736 = vmatpush.bf16.msra.mxu0 %v1099
      %1737 = vmatmul.bf16.gmra.mxu0 %v567
      %v1738 = vpop.f32.mrf.mxu0
      %v1739 = vadd.f32 %v1650, %v1738
      %v1740 = vpop.f32.mrf.mxu0
      %v1741 = vadd.f32 %v1652, %v1740
      %1742 = vmatmul.bf16.gmra.mxu0 %v570
      %v1743 = vpop.f32.mrf.mxu0
      %v1744 = vadd.f32 %v1655, %v1743
      %v1745 = vpop.f32.mrf.mxu0
      %v1746 = vadd.f32 %v1657, %v1745
      %1747 = vmatmul.bf16.gmra.mxu0 %v573
      %v1748 = vpop.f32.mrf.mxu0
      %v1749 = vadd.f32 %v1660, %v1748
      %v1750 = vpop.f32.mrf.mxu0
      %v1751 = vadd.f32 %v1662, %v1750
      %1752 = vmatmul.bf16.gmra.mxu0 %v576
      %v1753 = vpop.f32.mrf.mxu0
      %v1754 = vadd.f32 %v1665, %v1753
      %v1755 = vpop.f32.mrf.mxu0
      %v1756 = vadd.f32 %v1667, %v1755
      %1757 = vmatmul.bf16.gmra.mxu0 %v579
      %v1758 = vpop.f32.mrf.mxu0
      %v1759 = vadd.f32 %v1670, %v1758
      %v1760 = vpop.f32.mrf.mxu0
      %v1761 = vadd.f32 %v1672, %v1760
      %1762 = vmatmul.bf16.gmra.mxu0 %v582
      %v1763 = vpop.f32.mrf.mxu0
      %v1764 = vadd.f32 %v1675, %v1763
      %v1765 = vpop.f32.mrf.mxu0
      %v1766 = vadd.f32 %v1677, %v1765
      %1767 = vmatmul.bf16.gmra.mxu0 %v585
      %v1768 = vpop.f32.mrf.mxu0
      %v1769 = vadd.f32 %v1680, %v1768
      %v1770 = vpop.f32.mrf.mxu0
      %v1771 = vadd.f32 %v1682, %v1770
      %1772 = vmatmul.bf16.gmra.mxu0 %v588
      %v1773 = vpop.f32.mrf.mxu0
      %v1774 = vadd.f32 %v1685, %v1773
      %v1775 = vpop.f32.mrf.mxu0
      %v1776 = vadd.f32 %v1687, %v1775
      %1777 = vmatmul.bf16.gmra.mxu0 %v591
      %v1778 = vpop.f32.mrf.mxu0
      %v1779 = vadd.f32 %v1690, %v1778
      %v1780 = vpop.f32.mrf.mxu0
      %v1781 = vadd.f32 %v1692, %v1780
      %1782 = vmatmul.bf16.gmra.mxu0 %v594
      %v1783 = vpop.f32.mrf.mxu0
      %v1784 = vadd.f32 %v1695, %v1783
      %v1785 = vpop.f32.mrf.mxu0
      %v1786 = vadd.f32 %v1697, %v1785
      %1787 = vmatmul.bf16.gmra.mxu0 %v597
      %v1788 = vpop.f32.mrf.mxu0
      %v1789 = vadd.f32 %v1700, %v1788
      %v1790 = vpop.f32.mrf.mxu0
      %v1791 = vadd.f32 %v1702, %v1790
      %1792 = vmatmul.bf16.gmra.mxu0 %v600
      %v1793 = vpop.f32.mrf.mxu0
      %v1794 = vadd.f32 %v1705, %v1793
      %v1795 = vpop.f32.mrf.mxu0
      %v1796 = vadd.f32 %v1707, %v1795
      %1797 = vmatmul.bf16.gmra.mxu0 %v603
      %v1798 = vpop.f32.mrf.mxu0
      %v1799 = vadd.f32 %v1710, %v1798
      %v1800 = vpop.f32.mrf.mxu0
      %v1801 = vadd.f32 %v1712, %v1800
      %1802 = vmatmul.bf16.gmra.mxu0 %v606
      %v1803 = vpop.f32.mrf.mxu0
      %v1804 = vadd.f32 %v1715, %v1803
      %v1805 = vpop.f32.mrf.mxu0
      %v1806 = vadd.f32 %v1717, %v1805
      %1807 = vmatmul.bf16.gmra.mxu0 %v609
      %v1808 = vpop.f32.mrf.mxu0
      %v1809 = vadd.f32 %v1720, %v1808
      %v1810 = vpop.f32.mrf.mxu0
      %v1811 = vadd.f32 %v1722, %v1810
      %1812 = vmatmul.bf16.gmra.mxu0 %v612
      %v1813 = vpop.f32.mrf.mxu0
      %v1814 = vadd.f32 %v1725, %v1813
      %v1815 = vpop.f32.mrf.mxu0
      %v1816 = vadd.f32 %v1727, %v1815
      %1817 = vdwg.mxu0
      %1818 = vmatpush.bf16.msra.mxu0 %v1114
      %1819 = vmatpush.bf16.msra.mxu0 %v1113
      %1820 = vmatpush.bf16.msra.mxu0 %v1112
      %1821 = vmatpush.bf16.msra.mxu0 %v1111
      %1822 = vmatpush.bf16.msra.mxu0 %v1110
      %1823 = vmatpush.bf16.msra.mxu0 %v1109
      %1824 = vmatpush.bf16.msra.mxu0 %v1108
      %1825 = vmatpush.bf16.msra.mxu0 %v1107
      %1826 = vmatmul.bf16.gmra.mxu0 %v568
      %v1827 = vpop.f32.mrf.mxu0
      %v1828 = vadd.f32 %v1739, %v1827
      %v1829 = vpop.f32.mrf.mxu0
      %v1830 = vadd.f32 %v1741, %v1829
      %1831 = vmatmul.bf16.gmra.mxu0 %v571
      %v1832 = vpop.f32.mrf.mxu0
      %v1833 = vadd.f32 %v1744, %v1832
      %v1834 = vpop.f32.mrf.mxu0
      %v1835 = vadd.f32 %v1746, %v1834
      %1836 = vmatmul.bf16.gmra.mxu0 %v574
      %v1837 = vpop.f32.mrf.mxu0
      %v1838 = vadd.f32 %v1749, %v1837
      %v1839 = vpop.f32.mrf.mxu0
      %v1840 = vadd.f32 %v1751, %v1839
      %1841 = vmatmul.bf16.gmra.mxu0 %v577
      %v1842 = vpop.f32.mrf.mxu0
      %v1843 = vadd.f32 %v1754, %v1842
      %v1844 = vpop.f32.mrf.mxu0
      %v1845 = vadd.f32 %v1756, %v1844
      %1846 = vmatmul.bf16.gmra.mxu0 %v580
      %v1847 = vpop.f32.mrf.mxu0
      %v1848 = vadd.f32 %v1759, %v1847
      %v1849 = vpop.f32.mrf.mxu0
      %v1850 = vadd.f32 %v1761, %v1849
      %1851 = vmatmul.bf16.gmra.mxu0 %v583
      %v1852 = vpop.f32.mrf.mxu0
      %v1853 = vadd.f32 %v1764, %v1852
      %v1854 = vpop.f32.mrf.mxu0
      %v1855 = vadd.f32 %v1766, %v1854
      %1856 = vmatmul.bf16.gmra.mxu0 %v586
      %v1857 = vpop.f32.mrf.mxu0
      %v1858 = vadd.f32 %v1769, %v1857
      %v1859 = vpop.f32.mrf.mxu0
      %v1860 = vadd.f32 %v1771, %v1859
      %1861 = vmatmul.bf16.gmra.mxu0 %v589
      %v1862 = vpop.f32.mrf.mxu0
      %v1863 = vadd.f32 %v1774, %v1862
      %v1864 = vpop.f32.mrf.mxu0
      %v1865 = vadd.f32 %v1776, %v1864
      %1866 = vmatmul.bf16.gmra.mxu0 %v592
      %v1867 = vpop.f32.mrf.mxu0
      %v1868 = vadd.f32 %v1779, %v1867
      %v1869 = vpop.f32.mrf.mxu0
      %v1870 = vadd.f32 %v1781, %v1869
      %1871 = vmatmul.bf16.gmra.mxu0 %v595
      %v1872 = vpop.f32.mrf.mxu0
      %v1873 = vadd.f32 %v1784, %v1872
      %v1874 = vpop.f32.mrf.mxu0
      %v1875 = vadd.f32 %v1786, %v1874
      %1876 = vmatmul.bf16.gmra.mxu0 %v598
      %v1877 = vpop.f32.mrf.mxu0
      %v1878 = vadd.f32 %v1789, %v1877
      %v1879 = vpop.f32.mrf.mxu0
      %v1880 = vadd.f32 %v1791, %v1879
      %1881 = vmatmul.bf16.gmra.mxu0 %v601
      %v1882 = vpop.f32.mrf.mxu0
      %v1883 = vadd.f32 %v1794, %v1882
      %v1884 = vpop.f32.mrf.mxu0
      %v1885 = vadd.f32 %v1796, %v1884
      %1886 = vmatmul.bf16.gmra.mxu0 %v604
      %v1887 = vpop.f32.mrf.mxu0
      %v1888 = vadd.f32 %v1799, %v1887
      %v1889 = vpop.f32.mrf.mxu0
      %v1890 = vadd.f32 %v1801, %v1889
      %1891 = vmatmul.bf16.gmra.mxu0 %v607
      %v1892 = vpop.f32.mrf.mxu0
      %v1893 = vadd.f32 %v1804, %v1892
      %v1894 = vpop.f32.mrf.mxu0
      %v1895 = vadd.f32 %v1806, %v1894
      %1896 = vmatmul.bf16.gmra.mxu0 %v610
      %v1897 = vpop.f32.mrf.mxu0
      %v1898 = vadd.f32 %v1809, %v1897
      %v1899 = vpop.f32.mrf.mxu0
      %v1900 = vadd.f32 %v1811, %v1899
      %1901 = vmatmul.bf16.gmra.mxu0 %v613
      %v1902 = vpop.f32.mrf.mxu0
      %v1903 = vadd.f32 %v1814, %v1902
      %v1904 = vpop.f32.mrf.mxu0
      %v1905 = vadd.f32 %v1816, %v1904
      %1906 = vdwg.mxu0
      %1907 = vmatpush.bf16.msra.mxu0 %v1122
      %1908 = vmatpush.bf16.msra.mxu0 %v1121
      %1909 = vmatpush.bf16.msra.mxu0 %v1120
      %1910 = vmatpush.bf16.msra.mxu0 %v1119
      %1911 = vmatpush.bf16.msra.mxu0 %v1118
      %1912 = vmatpush.bf16.msra.mxu0 %v1117
      %1913 = vmatpush.bf16.msra.mxu0 %v1116
      %1914 = vmatpush.bf16.msra.mxu0 %v1115
      %1915 = vmatmul.bf16.gmra.mxu0 %v569
      %v1916 = vpop.f32.mrf.mxu0
      %v1917 = vadd.f32 %v1828, %v1916
      %v1918 = vpop.f32.mrf.mxu0
      %v1919 = vadd.f32 %v1830, %v1918
      %1920 = vmatmul.bf16.gmra.mxu0 %v572
      %v1921 = vpop.f32.mrf.mxu0
      %v1922 = vadd.f32 %v1833, %v1921
      %v1923 = vpop.f32.mrf.mxu0
      %v1924 = vadd.f32 %v1835, %v1923
      %1925 = vmatmul.bf16.gmra.mxu0 %v575
      %v1926 = vpop.f32.mrf.mxu0
      %v1927 = vadd.f32 %v1838, %v1926
      %v1928 = vpop.f32.mrf.mxu0
      %v1929 = vadd.f32 %v1840, %v1928
      %1930 = vmatmul.bf16.gmra.mxu0 %v578
      %v1931 = vpop.f32.mrf.mxu0
      %v1932 = vadd.f32 %v1843, %v1931
      %v1933 = vpop.f32.mrf.mxu0
      %v1934 = vadd.f32 %v1845, %v1933
      %1935 = vmatmul.bf16.gmra.mxu0 %v581
      %v1936 = vpop.f32.mrf.mxu0
      %v1937 = vadd.f32 %v1848, %v1936
      %v1938 = vpop.f32.mrf.mxu0
      %v1939 = vadd.f32 %v1850, %v1938
      %1940 = vmatmul.bf16.gmra.mxu0 %v584
      %v1941 = vpop.f32.mrf.mxu0
      %v1942 = vadd.f32 %v1853, %v1941
      %v1943 = vpop.f32.mrf.mxu0
      %v1944 = vadd.f32 %v1855, %v1943
      %1945 = vmatmul.bf16.gmra.mxu0 %v587
      %v1946 = vpop.f32.mrf.mxu0
      %v1947 = vadd.f32 %v1858, %v1946
      %v1948 = vpop.f32.mrf.mxu0
      %v1949 = vadd.f32 %v1860, %v1948
      %1950 = vmatmul.bf16.gmra.mxu0 %v590
      %v1951 = vpop.f32.mrf.mxu0
      %v1952 = vadd.f32 %v1863, %v1951
      %v1953 = vpop.f32.mrf.mxu0
      %v1954 = vadd.f32 %v1865, %v1953
      %1955 = vmatmul.bf16.gmra.mxu0 %v593
      %v1956 = vpop.f32.mrf.mxu0
      %v1957 = vadd.f32 %v1868, %v1956
      %v1958 = vpop.f32.mrf.mxu0
      %v1959 = vadd.f32 %v1870, %v1958
      %1960 = vmatmul.bf16.gmra.mxu0 %v596
      %v1961 = vpop.f32.mrf.mxu0
      %v1962 = vadd.f32 %v1873, %v1961
      %v1963 = vpop.f32.mrf.mxu0
      %v1964 = vadd.f32 %v1875, %v1963
      %1965 = vmatmul.bf16.gmra.mxu0 %v599
      %v1966 = vpop.f32.mrf.mxu0
      %v1967 = vadd.f32 %v1878, %v1966
      %v1968 = vpop.f32.mrf.mxu0
      %v1969 = vadd.f32 %v1880, %v1968
      %1970 = vmatmul.bf16.gmra.mxu0 %v602
      %v1971 = vpop.f32.mrf.mxu0
      %v1972 = vadd.f32 %v1883, %v1971
      %v1973 = vpop.f32.mrf.mxu0
      %v1974 = vadd.f32 %v1885, %v1973
      %1975 = vmatmul.bf16.gmra.mxu0 %v605
      %v1976 = vpop.f32.mrf.mxu0
      %v1977 = vadd.f32 %v1888, %v1976
      %v1978 = vpop.f32.mrf.mxu0
      %v1979 = vadd.f32 %v1890, %v1978
      %1980 = vmatmul.bf16.gmra.mxu0 %v608
      %v1981 = vpop.f32.mrf.mxu0
      %v1982 = vadd.f32 %v1893, %v1981
      %v1983 = vpop.f32.mrf.mxu0
      %v1984 = vadd.f32 %v1895, %v1983
      %1985 = vmatmul.bf16.gmra.mxu0 %v611
      %v1986 = vpop.f32.mrf.mxu0
      %v1987 = vadd.f32 %v1898, %v1986
      %v1988 = vpop.f32.mrf.mxu0
      %v1989 = vadd.f32 %v1900, %v1988
      %1990 = vmatmul.bf16.gmra.mxu0 %v614
      %v1991 = vpop.f32.mrf.mxu0
      %v1992 = vadd.f32 %v1903, %v1991
      %v1993 = vpop.f32.mrf.mxu0
      %v1994 = vadd.f32 %v1905, %v1993
      %1995 = vdwg.mxu0
      %1996 = vst [vmem:[%s194] sm:$0xff] %v1917
      %1997 = vst [vmem:[%s194 + $0x8] sm:$0xff] %v1919
      %1998 = vst [vmem:[%s194 + $0x10] sm:$0xff] %v1922
      %1999 = vst [vmem:[%s194 + $0x18] sm:$0xff] %v1924
      %2000 = vst [vmem:[%s194 + $0x20] sm:$0xff] %v1927
      %2001 = vst [vmem:[%s194 + $0x28] sm:$0xff] %v1929
      %2002 = vst [vmem:[%s194 + $0x30] sm:$0xff] %v1932
      %2003 = vst [vmem:[%s194 + $0x38] sm:$0xff] %v1934
      %2004 = vst [vmem:[%s194 + $0x40] sm:$0xff] %v1937
      %2005 = vst [vmem:[%s194 + $0x48] sm:$0xff] %v1939
      %2006 = vst [vmem:[%s194 + $0x50] sm:$0xff] %v1942
      %2007 = vst [vmem:[%s194 + $0x58] sm:$0xff] %v1944
      %2008 = vst [vmem:[%s194 + $0x60] sm:$0xff] %v1947
      %2009 = vst [vmem:[%s194 + $0x68] sm:$0xff] %v1949
      %2010 = vst [vmem:[%s194 + $0x70] sm:$0xff] %v1952
      %2011 = vst [vmem:[%s194 + $0x78] sm:$0xff] %v1954
      %2012 = vst [vmem:[%s194 + $0x80] sm:$0xff] %v1957
      %2013 = vst [vmem:[%s194 + $0x88] sm:$0xff] %v1959
      %2014 = vst [vmem:[%s194 + $0x90] sm:$0xff] %v1962
      %2015 = vst [vmem:[%s194 + $0x98] sm:$0xff] %v1964
      %2016 = vst [vmem:[%s194 + $0xa0] sm:$0xff] %v1967
      %2017 = vst [vmem:[%s194 + $0xa8] sm:$0xff] %v1969
      %2018 = vst [vmem:[%s194 + $0xb0] sm:$0xff] %v1972
      %2019 = vst [vmem:[%s194 + $0xb8] sm:$0xff] %v1974
      %2020 = vst [vmem:[%s194 + $0xc0] sm:$0xff] %v1977
      %2021 = vst [vmem:[%s194 + $0xc8] sm:$0xff] %v1979
      %2022 = vst [vmem:[%s194 + $0xd0] sm:$0xff] %v1982
      %2023 = vst [vmem:[%s194 + $0xd8] sm:$0xff] %v1984
      %2024 = vst [vmem:[%s194 + $0xe0] sm:$0xff] %v1987
      %2025 = vst [vmem:[%s194 + $0xe8] sm:$0xff] %v1989
      %2026 = vst [vmem:[%s194 + $0xf0] sm:$0xff] %v1992
      %2027 = vst [vmem:[%s194 + $0xf8] sm:$0xff] %v1994
      %s2028 = smul.u32 16, %s19
      %p2029 = scmp.lt.s32.totalorder %s18, 1
      %s2030 = scalar_select %p2029, %s18, 1
      %p2031 = scmp.lt.s32.totalorder %s2028, 15
      %s2032 = scalar_select %p2031, %s2028, 15
      %s2033 = smul.addr %s2032, 2
      %s2034 = smul.addr %s2030, 32
      %s2035 = sadd.s32 %s2033, %s2034
      %s2036 = smul.addr %s2035, 8
      %s2037 = scalar_lea.vmem %s3, %s2036
      // Predicated region
      $region33: #{dsc_forward.1} parent=31 // pred_check
        %p2038 = pneg %p114
      $region34: #{dsc_forward.1} parent=31 // pred_check_branch
        %2040 = sbr.rel (%p2038) target = $region36
      $region35: #{dsc_forward.1} parent=31 // pred_region
        %s2041 = smul.u32 16, %s19
      $region36: #{dsc_forward.1} parent=31 // pred_fallthru
        _
    $region32: #{dsc_forward.1} parent=5 // pred_fallthru
      _
    %p2042 = scmp.le.s32.totalorder 2, %s9
    // Predicated region
    $region37: #{dsc_forward.1} parent=5 // pred_check
      %p2043 = pneg %p2042
    $region38: #{dsc_forward.1} parent=5 // pred_check_branch
      %2045 = sbr.rel (%p2043) target = $region40
    $region39: #{dsc_forward.1} parent=5 // pred_region
      %s2046 = ssub.s32 %s9, 2
      // Predicated region
      $region41: #{dsc_forward.1} parent=39 // pred_check
        %p2047 = pneg %p120
      $region42: #{dsc_forward.1} parent=39 // pred_check_branch
        %2049 = sbr.rel (%p2047) target = $region44
      $region43: #{dsc_forward.1} parent=39 // pred_region
        %s2050 = smul.u32 16, %s21
        %p2051 = scmp.lt.s32.totalorder %s20, 1
        %s2052 = scalar_select %p2051, %s20, 1
        %p2053 = scmp.lt.s32.totalorder %s2050, 15
        %s2054 = scalar_select %p2053, %s2050, 15
        %s2055 = smul.addr %s2054, 2
        %s2056 = smul.addr %s2052, 32
        %s2057 = sadd.s32 %s2055, %s2056
        %s2058 = smul.addr %s2057, 8
        %s2059 = scalar_lea.vmem %s3, %s2058
      $region44: #{dsc_forward.1} parent=39 // pred_fallthru
        _
    $region40: #{dsc_forward.1} parent=5 // pred_fallthru
      _
  $region6: #{dsc_forward.1} parent=0 // loop_footer
    %s13 = sadd.s32 1, %s9
  $region7: #{dsc_forward.1} parent=0 // loop_footer_branch
    %8 = sbr.rel target = $region3
  $region8: #{dsc_forward.1} parent=0 // loop_exit
    _

</llo_original>
